<compile_context>
chip_gen: v5e
topology: v5e:2x2
jax: 0.10.0
libtpu: 0.0.40
codegen_flags: <defaults>
</compile_context>

<pallas_src>
import functools
import math

import jax
import jax.numpy as jnp
from jax.experimental import pallas as pl
from jax.experimental.pallas import tpu as pltpu


def _round_up(n, m):
    return ((n + m - 1) // m) * m


def _vmem_limit_bytes():
    """Per-generation scoped-VMEM budget (review: size against v7x's 64 MiB)."""
    phys = 128 * 1024 * 1024
    try:
        phys = int(getattr(pltpu.get_tpu_info(), "vmem_capacity_bytes", phys))
    except Exception:
        pass
    if phys <= 64 * 1024 * 1024:          # v7x-class: 64 MiB physical VMEM
        return 48 * 1024 * 1024
    return 96 * 1024 * 1024               # v5e / v6e: 128 MiB physical VMEM


_VMEM_LIMIT = _vmem_limit_bytes()

_MODE_TILE_CAP = 256        # modes-axis tile cap (review: 64 was too small)
_LANE_TILE_CAP = 8192       # pointwise spatial tile cap (multiple of 128)


def _tile_and_pad(n, cap, align=1):
    """Choose tile <= cap (rounded up to `align`) and the padded extent."""
    steps = pl.cdiv(n, cap)
    tile = _round_up(pl.cdiv(n, steps), align)
    return tile, tile * steps


# ----------------------------------------------------------------------------
# Kernel 1: fused spectral mode mixing (both corners, real+imag)
#   out[m, b, :Cp]  = Re( x[m,b,:] @ w[m,:,:] )
#   out[m, b, Cp:]  = Im( x[m,b,:] @ w[m,:,:] )
# Blocks: xr/xi (tm, B, Cin) bf16, w (tm, Cin, 2*Cp) bf16 = [wr | wi],
#         out (tm, B, 2*Cp) f32.
# ----------------------------------------------------------------------------
def _spectral_kernel(xr_ref, xi_ref, w_ref, o_ref):
    xr = xr_ref[...]                       # Re(x_ft)   (tm, B, Cin) bf16
    xi = xi_ref[...]                       # Im(x_ft)
    w = w_ref[...]                         # [wr | wi]  (tm, Cin, 2*Cp) bf16
    cp = w.shape[-1] // 2
    # Two batched MXU matmuls with the modes axis as the batch dim; bf16
    # inputs, f32 accumulation (native fast path on v6e/v7x).
    yr = jnp.einsum('mbi,mio->mbo', xr, w, preferred_element_type=jnp.float32)
    yi = jnp.einsum('mbi,mio->mbo', xi, w, preferred_element_type=jnp.float32)
    # real = xr@wr - xi@wi ; imag = xr@wi + xi@wr  (VPU add/sub of lane halves)
    o_ref[:, :, :cp] = yr[:, :, :cp] - yi[:, :, cp:]
    o_ref[:, :, cp:] = yr[:, :, cp:] + yi[:, :, :cp]


def _spectral_mix(x_ft, wr1, wi1, wr2, wi2, modes1, modes2):
    """x_ft: (B, Cin, X, Tf) complex64 -> (out1, out2) complex (B,Cout,m1,m2)."""
    B, Cin, X, _ = x_ft.shape
    Cout = wr1.shape[1]
    # Pad Cout so the output lane width 2*Cp is a multiple of 128 (lane-dense
    # stores) without blowing up the weight stream for realistic widths.
    Cp = _round_up(Cout, 64)
    M = modes1 * modes2
    Mtot = 2 * M

    # --- wrapper-side layout plumbing (fused under the layer-level jit) ---
    def prep_x(corner):                    # (B,Cin,m1,m2) -> 2x (M,B,Cin) bf16
        flat = corner.reshape(B, Cin, M)
        r = jnp.real(flat).transpose(2, 0, 1).astype(jnp.bfloat16)
        i = jnp.imag(flat).transpose(2, 0, 1).astype(jnp.bfloat16)
        return r, i

    xr1, xi1 = prep_x(x_ft[:, :, :modes1, :modes2])
    xr2, xi2 = prep_x(x_ft[:, :, X - modes1:, :modes2])
    xr = jnp.concatenate([xr1, xr2], axis=0)          # (Mtot, B, Cin)
    xi = jnp.concatenate([xi1, xi2], axis=0)

    def prep_w(wr, wi):                    # -> (M, Cin, 2*Cp) bf16, [wr | wi]
        def lay(w):
            w = w.reshape(Cin, Cout, M).transpose(2, 0, 1)     # (M, Cin, Cout)
            if Cp != Cout:
                w = jnp.pad(w, ((0, 0), (0, 0), (0, Cp - Cout)))
            return w
        return jnp.concatenate([lay(wr), lay(wi)], axis=-1).astype(jnp.bfloat16)

    w_all = jnp.concatenate([prep_w(wr1, wi1), prep_w(wr2, wi2)], axis=0)

    # Modes-axis tiling: pad with zeros instead of requiring divisibility.
    tm, Mpad = _tile_and_pad(Mtot, _MODE_TILE_CAP)
    if Mpad != Mtot:
        pad = ((0, Mpad - Mtot), (0, 0), (0, 0))
        xr = jnp.pad(xr, pad)
        xi = jnp.pad(xi, pad)
        w_all = jnp.pad(w_all, pad)

    out = pl.pallas_call(
        _spectral_kernel,
        grid=(Mpad // tm,),
        out_shape=jax.ShapeDtypeStruct((Mpad, B, 2 * Cp), jnp.float32),
        in_specs=[
            pl.BlockSpec((tm, B, Cin), lambda m: (m, 0, 0)),        # xr
            pl.BlockSpec((tm, B, Cin), lambda m: (m, 0, 0)),        # xi
            pl.BlockSpec((tm, Cin, 2 * Cp), lambda m: (m, 0, 0)),   # [wr|wi]
        ],
        out_specs=pl.BlockSpec((tm, B, 2 * Cp), lambda m: (m, 0, 0)),
        compiler_params=pltpu.CompilerParams(
            dimension_semantics=("parallel",),
            vmem_limit_bytes=_VMEM_LIMIT),
    )(xr, xi, w_all)

    out_c = jax.lax.complex(out[:Mtot, :, :Cout],
                            out[:Mtot, :, Cp:Cp + Cout])            # (Mtot,B,Cout)
    out_c = out_c.transpose(1, 2, 0)                                # (B,Cout,Mtot)
    out1 = out_c[:, :, :M].reshape(B, Cout, modes1, modes2)
    out2 = out_c[:, :, M:].reshape(B, Cout, modes1, modes2)
    return out1, out2


# ----------------------------------------------------------------------------
# Kernel 2: fused 1x1 conv (bf16-in / f32-acc channel matmul) + residual + GELU
# Blocks: x1/x/out (1, C, tn) with tn a multiple of 128; w (C, C) bf16; b (C,1)
# ----------------------------------------------------------------------------
def _pointwise_kernel(x1_ref, x_ref, w_ref, b_ref, o_ref, *, apply_gelu):
    xb = x_ref[0].astype(jnp.bfloat16)                              # (C, tn)
    # bf16 inputs, f32 accumulation on the MXU; weight ships pre-cast bf16.
    x2 = jnp.dot(w_ref[...], xb, preferred_element_type=jnp.float32) + b_ref[...]
    y = x1_ref[0] + x2                                              # f32 residual
    if apply_gelu:
        # exact GELU (matches torch.nn.functional.gelu default)
        y = 0.5 * y * (1.0 + jax.lax.erf(y * 0.7071067811865476))
    o_ref[0] = y.astype(o_ref.dtype)


def _pointwise(x1, x, conv_w, conv_b, *, last):
    B, C, X, T = x.shape
    N = X * T
    tn, Npad = _tile_and_pad(N, _LANE_TILE_CAP, align=128)
    x1f = x1.reshape(B, C, N)
    xf = x.reshape(B, C, N)
    if Npad != N:
        pad = ((0, 0), (0, 0), (0, Npad - N))
        x1f = jnp.pad(x1f, pad)
        xf = jnp.pad(xf, pad)
    w_bf16 = conv_w.astype(jnp.bfloat16)          # pre-cast once in the wrapper
    bias = conv_b.reshape(C, 1).astype(jnp.float32)
    kernel = functools.partial(_pointwise_kernel, apply_gelu=not last)
    out = pl.pallas_call(
        kernel,
        grid=(B, Npad // tn),
        out_shape=jax.ShapeDtypeStruct((B, C, Npad), jnp.float32),
        in_specs=[
            pl.BlockSpec((1, C, tn), lambda b, n: (b, 0, n)),   # x1 (residual)
            pl.BlockSpec((1, C, tn), lambda b, n: (b, 0, n)),   # x
            pl.BlockSpec((C, C), lambda b, n: (0, 0)),          # conv weight bf16
            pl.BlockSpec((C, 1), lambda b, n: (0, 0)),          # conv bias
        ],
        out_specs=pl.BlockSpec((1, C, tn), lambda b, n: (b, 0, n)),
        compiler_params=pltpu.CompilerParams(
            dimension_semantics=("parallel", "parallel"),
            vmem_limit_bytes=_VMEM_LIMIT),
    )(x1f, xf, w_bf16, bias)
    return out[:, :, :N].reshape(B, C, X, T)


# ----------------------------------------------------------------------------
# FNO_layer forward
# ----------------------------------------------------------------------------
def fno_layer_forward(x, params, *, modes1, modes2, last=False):
    """x: (B, C, X, T) float32 — same convention as the PyTorch module."""
    wr1, wi1, wr2, wi2, conv_w, conv_b = params
    B, C, X, T = x.shape
    Tf = T // 2 + 1

    # TODO(synk): rfft2/irfft2 have no Pallas equivalent; computed in plain JAX.
    x_ft = jnp.fft.rfft2(x)

    out1, out2 = _spectral_mix(x_ft, wr1, wi1, wr2, wi2, modes1, modes2)

    # TODO(synk): the corner scatter into the zero-frequency buffer stays in
    # JAX (tiny vs. the FFTs; fuses with them under the layer-level jit).
    out_ft = jnp.zeros((B, C, X, Tf), dtype=jnp.complex64)
    out_ft = out_ft.at[:, :, :modes1, :modes2].set(out1)
    out_ft = out_ft.at[:, :, X - modes1:, :modes2].set(out2)
    x1 = jnp.fft.irfft2(out_ft, s=(X, T)).astype(jnp.float32)

    return _pointwise(x1, x, conv_w, conv_b, last=last)


# ----------------------------------------------------------------------------
# Pure-JAX reference (mirrors the PyTorch forward) for verification
# ----------------------------------------------------------------------------
def fno_layer_reference(x, params, *, modes1, modes2, last=False):
    wr1, wi1, wr2, wi2, conv_w, conv_b = params
    B, C, X, T = x.shape
    Tf = T // 2 + 1
    w1 = wr1 + 1j * wi1
    w2 = wr2 + 1j * wi2
    x_ft = jnp.fft.rfft2(x)
    out_ft = jnp.zeros((B, C, X, Tf), dtype=jnp.complex64)
    out_ft = out_ft.at[:, :, :modes1, :modes2].set(
        jnp.einsum('bixt,ioxt->boxt', x_ft[:, :, :modes1, :modes2], w1))
    out_ft = out_ft.at[:, :, X - modes1:, :modes2].set(
        jnp.einsum('bixt,ioxt->boxt', x_ft[:, :, X - modes1:, :modes2], w2))
    x1 = jnp.fft.irfft2(out_ft, s=(X, T)).real.astype(jnp.float32)
    x2 = jnp.einsum('oi,bixt->boxt', conv_w, x) + conv_b[None, :, None, None]
    y = x1 + x2
    if not last:
        y = jax.nn.gelu(y, approximate=False)
    return y


# ----------------------------------------------------------------------------
# Deterministic parameter init (shapes from FNO_layer.__init__)
# ----------------------------------------------------------------------------
def init_params(key, width, modes1, modes2):
    scale = 1.0 / (width * width)
    k = jax.random.split(key, 6)
    wr1 = scale * jax.random.uniform(k[0], (width, width, modes1, modes2), jnp.float32)
    wi1 = scale * jax.random.uniform(k[1], (width, width, modes1, modes2), jnp.float32)
    wr2 = scale * jax.random.uniform(k[2], (width, width, modes1, modes2), jnp.float32)
    wi2 = scale * jax.random.uniform(k[3], (width, width, modes1, modes2), jnp.float32)
    # nn.Conv2d(width, width, 1): weight (out, in, 1, 1) -> stored (C_out, C_in); bias (width,)
    bound = 1.0 / math.sqrt(width)
    conv_w = jax.random.uniform(k[4], (width, width), jnp.float32, -bound, bound)
    conv_b = jax.random.uniform(k[5], (width,), jnp.float32, -bound, bound)
    return (wr1, wi1, wr2, wi2, conv_w, conv_b)


if __name__ == "__main__":
    B, width, X, T = 2, 8, 16, 16
    modes1, modes2 = 4, 4

    key = jax.random.PRNGKey(0)
    kx, kp = jax.random.split(key)
    x = jax.random.normal(kx, (B, width, X, T), dtype=jnp.float32)
    params = init_params(kp, width, modes1, modes2)

    # Whole layer under one jit so prep transposes / scatter fuse with the FFTs.
    fwd = jax.jit(functools.partial(
        fno_layer_forward, modes1=modes1, modes2=modes2, last=False))
    out = jax.block_until_ready(fwd(x, params))

    ref = fno_layer_reference(x, params, modes1=modes1, modes2=modes2, last=False)
    assert out.shape == (B, width, X, T)
    # Tolerance accounts for the deliberate bf16-input / f32-accumulate matmuls
    # in both the spectral and 1x1-conv paths (per perf review); structure and
    # semantics match the f32 reference.
    assert jnp.allclose(out, ref, atol=2e-2, rtol=2e-2), (
        f"max abs err = {jnp.max(jnp.abs(out - ref))}")

    print("KERNEL_OK")
</pallas_src>

<mosaic_0001>
module attributes {stable_mosaic.version = 11 : i64} {
  func.func @_spectral_kernel(%arg0: i32, %arg1: memref<32x2x8xbf16, #tpu.memory_space<vmem>>, %arg2: memref<32x2x8xbf16, #tpu.memory_space<vmem>>, %arg3: memref<32x8x128xbf16, #tpu.memory_space<vmem>>, %arg4: memref<32x2x128xf32, #tpu.memory_space<vmem>>) attributes {dimension_semantics = [#tpu.dimension_semantics<parallel>], iteration_bounds = array<i64: 1>, scalar_prefetch = 0 : i64, scratch_operands = 0 : i64, tpu.core_type = #tpu.core_type<tc>, window_params = [{transform_indices = @transform_0, window_bounds = array<i64: 32, 2, 8>}, {transform_indices = @transform_1, window_bounds = array<i64: 32, 2, 8>}, {transform_indices = @transform_2, window_bounds = array<i64: 32, 8, 128>}, {transform_indices = @transform_3, window_bounds = array<i64: 32, 2, 128>}]} {
    %c0 = arith.constant 0 : index
    %c0_0 = arith.constant 0 : index
    %c0_1 = arith.constant 0 : index
    %0 = vector.load %arg1[%c0, %c0_0, %c0_1] : memref<32x2x8xbf16, #tpu.memory_space<vmem>>, vector<32x2x8xbf16>
    %c0_2 = arith.constant 0 : index
    %c0_3 = arith.constant 0 : index
    %c0_4 = arith.constant 0 : index
    %1 = vector.load %arg2[%c0_2, %c0_3, %c0_4] : memref<32x2x8xbf16, #tpu.memory_space<vmem>>, vector<32x2x8xbf16>
    %c0_5 = arith.constant 0 : index
    %c0_6 = arith.constant 0 : index
    %c0_7 = arith.constant 0 : index
    %2 = vector.load %arg3[%c0_5, %c0_6, %c0_7] : memref<32x8x128xbf16, #tpu.memory_space<vmem>>, vector<32x8x128xbf16>
    "tpu.trace_start"() <{level = 10 : i32, message = "mbi,mio->mbo"}> : () -> ()
    %cst = arith.constant dense<0.000000e+00> : vector<32x2x128xf32>
    %3 = tpu.matmul %0, %2, %cst {dimension_numbers = #tpu.dot_dimension_numbers<[2], [1], [1], [2], [0, 0, 0, 1, 1, 2], [0], [0]>} : vector<32x2x8xbf16>, vector<32x8x128xbf16>, vector<32x2x128xf32> -> vector<32x2x128xf32>
    %cst_8 = arith.constant dense<0.000000e+00> : vector<32x2x128xf32>
    %4 = tpu.matmul %1, %2, %cst_8 {dimension_numbers = #tpu.dot_dimension_numbers<[2], [1], [1], [2], [0, 0, 0, 1, 1, 2], [0], [0]>} : vector<32x2x8xbf16>, vector<32x8x128xbf16>, vector<32x2x128xf32> -> vector<32x2x128xf32>
    "tpu.trace_stop"() : () -> ()
    %5 = vector.extract_strided_slice %3 {offsets = [0, 0, 0], sizes = [32, 2, 64], strides = [1, 1, 1]} : vector<32x2x128xf32> to vector<32x2x64xf32>
    %6 = vector.extract_strided_slice %4 {offsets = [0, 0, 64], sizes = [32, 2, 64], strides = [1, 1, 1]} : vector<32x2x128xf32> to vector<32x2x64xf32>
    %7 = arith.subf %5, %6 : vector<32x2x64xf32>
    %c0_9 = arith.constant 0 : index
    %c0_10 = arith.constant 0 : index
    %c0_11 = arith.constant 0 : index
    %8 = vector.load %arg4[%c0_9, %c0_10, %c0_11] : memref<32x2x128xf32, #tpu.memory_space<vmem>>, vector<32x2x64xf32>
    tpu.vector_store %arg4[%c0_9, %c0_10, %c0_11], %7 {strides = array<i32>} : memref<32x2x128xf32, #tpu.memory_space<vmem>>, vector<32x2x64xf32>,
    %9 = vector.extract_strided_slice %3 {offsets = [0, 0, 64], sizes = [32, 2, 64], strides = [1, 1, 1]} : vector<32x2x128xf32> to vector<32x2x64xf32>
    %10 = vector.extract_strided_slice %4 {offsets = [0, 0, 0], sizes = [32, 2, 64], strides = [1, 1, 1]} : vector<32x2x128xf32> to vector<32x2x64xf32>
    %11 = arith.addf %9, %10 : vector<32x2x64xf32>
    %c0_12 = arith.constant 0 : index
    %c0_13 = arith.constant 0 : index
    %c64 = arith.constant 64 : index
    %12 = vector.load %arg4[%c0_12, %c0_13, %c64] : memref<32x2x128xf32, #tpu.memory_space<vmem>>, vector<32x2x64xf32>
    tpu.vector_store %arg4[%c0_12, %c0_13, %c64], %11 {strides = array<i32>} : memref<32x2x128xf32, #tpu.memory_space<vmem>>, vector<32x2x64xf32>,
    return
  }
  func.func @transform_0(%arg0: i32) -> (i32, i32, i32) {
    %c0_i32 = arith.constant 0 : i32
    %c0_i32_0 = arith.constant 0 : i32
    %c0_i32_1 = arith.constant 0 : i32
    return %arg0, %c0_i32, %c0_i32_0 : i32, i32, i32
  }
  func.func @transform_1(%arg0: i32) -> (i32, i32, i32) {
    %c0_i32 = arith.constant 0 : i32
    %c0_i32_0 = arith.constant 0 : i32
    %c0_i32_1 = arith.constant 0 : i32
    return %arg0, %c0_i32, %c0_i32_0 : i32, i32, i32
  }
  func.func @transform_2(%arg0: i32) -> (i32, i32, i32) {
    %c0_i32 = arith.constant 0 : i32
    %c0_i32_0 = arith.constant 0 : i32
    %c0_i32_1 = arith.constant 0 : i32
    return %arg0, %c0_i32, %c0_i32_0 : i32, i32, i32
  }
  func.func @transform_3(%arg0: i32) -> (i32, i32, i32) {
    %c0_i32 = arith.constant 0 : i32
    %c0_i32_0 = arith.constant 0 : i32
    %c0_i32_1 = arith.constant 0 : i32
    return %arg0, %c0_i32, %c0_i32_0 : i32, i32, i32
  }
}

module attributes {stable_mosaic.version = 11 : i64} {
  func.func @_pointwise_kernel(%arg0: i32, %arg1: i32, %arg2: memref<1x8x256xf32, #tpu.memory_space<vmem>>, %arg3: memref<1x8x256xf32, #tpu.memory_space<vmem>>, %arg4: memref<8x8xbf16, #tpu.memory_space<vmem>>, %arg5: memref<8x1xf32, #tpu.memory_space<vmem>>, %arg6: memref<1x8x256xf32, #tpu.memory_space<vmem>>) attributes {dimension_semantics = [#tpu.dimension_semantics<parallel>, #tpu.dimension_semantics<parallel>], iteration_bounds = array<i64: 2, 1>, scalar_prefetch = 0 : i64, scratch_operands = 0 : i64, tpu.core_type = #tpu.core_type<tc>, window_params = [{transform_indices = @transform_0, window_bounds = array<i64: 1, 8, 256>}, {transform_indices = @transform_1, window_bounds = array<i64: 1, 8, 256>}, {pipeline_mode = #tpu.pipeline_mode<synchronous>, transform_indices = @transform_2, window_bounds = array<i64: 8, 8>}, {pipeline_mode = #tpu.pipeline_mode<synchronous>, transform_indices = @transform_3, window_bounds = array<i64: 8, 1>}, {transform_indices = @transform_4, window_bounds = array<i64: 1, 8, 256>}]} {
    %c0 = arith.constant 0 : index
    %c0_0 = arith.constant 0 : index
    %c0_1 = arith.constant 0 : index
    %0 = vector.load %arg3[%c0, %c0_0, %c0_1] : memref<1x8x256xf32, #tpu.memory_space<vmem>>, vector<1x8x256xf32>
    %1 = vector.shape_cast %0 : vector<1x8x256xf32> to vector<8x256xf32>
    %2 = arith.truncf %1 : vector<8x256xf32> to vector<8x256xbf16>
    %c0_2 = arith.constant 0 : index
    %c0_3 = arith.constant 0 : index
    %3 = vector.load %arg4[%c0_2, %c0_3] : memref<8x8xbf16, #tpu.memory_space<vmem>>, vector<8x8xbf16>
    %cst = arith.constant dense<0.000000e+00> : vector<8x256xf32>
    %4 = tpu.matmul %3, %2, %cst {dimension_numbers = #tpu.dot_dimension_numbers<[1], [0], [0], [1], [0, 0, 1, 1], [], []>} : vector<8x8xbf16>, vector<8x256xbf16>, vector<8x256xf32> -> vector<8x256xf32>
    %c0_4 = arith.constant 0 : index
    %c0_5 = arith.constant 0 : index
    %5 = vector.load %arg5[%c0_4, %c0_5] : memref<8x1xf32, #tpu.memory_space<vmem>>, vector<8x1xf32>
    %6 = vector.broadcast %5 : vector<8x1xf32> to vector<8x256xf32>
    %7 = arith.addf %4, %6 : vector<8x256xf32>
    %c0_6 = arith.constant 0 : index
    %c0_7 = arith.constant 0 : index
    %c0_8 = arith.constant 0 : index
    %8 = vector.load %arg2[%c0_6, %c0_7, %c0_8] : memref<1x8x256xf32, #tpu.memory_space<vmem>>, vector<1x8x256xf32>
    %9 = vector.shape_cast %8 : vector<1x8x256xf32> to vector<8x256xf32>
    %10 = arith.addf %9, %7 : vector<8x256xf32>
    %cst_9 = arith.constant 5.000000e-01 : f32
    %11 = vector.broadcast %cst_9 : f32 to vector<8x256xf32>
    %12 = arith.mulf %11, %10 : vector<8x256xf32>
    %cst_10 = arith.constant 0.707106769 : f32
    %13 = vector.broadcast %cst_10 : f32 to vector<8x256xf32>
    %14 = arith.mulf %10, %13 : vector<8x256xf32>
    %15 = math.erf %14 : vector<8x256xf32>
    %cst_11 = arith.constant 1.000000e+00 : f32
    %16 = vector.broadcast %cst_11 : f32 to vector<8x256xf32>
    %17 = arith.addf %16, %15 : vector<8x256xf32>
    %18 = arith.mulf %12, %17 : vector<8x256xf32>
    %c0_12 = arith.constant 0 : index
    %c0_13 = arith.constant 0 : index
    %c0_14 = arith.constant 0 : index
    %19 = vector.load %arg6[%c0_12, %c0_13, %c0_14] : memref<1x8x256xf32, #tpu.memory_space<vmem>>, vector<1x8x256xf32>
    %20 = vector.shape_cast %19 : vector<1x8x256xf32> to vector<8x256xf32>
    %21 = vector.shape_cast %18 : vector<8x256xf32> to vector<1x8x256xf32>
    tpu.vector_store %arg6[%c0_12, %c0_13, %c0_14], %21 {strides = array<i32>} : memref<1x8x256xf32, #tpu.memory_space<vmem>>, vector<1x8x256xf32>,
    return
  }
  func.func @transform_0(%arg0: i32, %arg1: i32) -> (i32, i32, i32) {
    %c0_i32 = arith.constant 0 : i32
    %c0_i32_0 = arith.constant 0 : i32
    return %arg0, %c0_i32, %arg1 : i32, i32, i32
  }
  func.func @transform_1(%arg0: i32, %arg1: i32) -> (i32, i32, i32) {
    %c0_i32 = arith.constant 0 : i32
    %c0_i32_0 = arith.constant 0 : i32
    return %arg0, %c0_i32, %arg1 : i32, i32, i32
  }
  func.func @transform_2(%arg0: i32, %arg1: i32) -> (i32, i32) {
    %c0_i32 = arith.constant 0 : i32
    %c0_i32_0 = arith.constant 0 : i32
    %c0_i32_1 = arith.constant 0 : i32
    return %c0_i32, %c0_i32_0 : i32, i32
  }
  func.func @transform_3(%arg0: i32, %arg1: i32) -> (i32, i32) {
    %c0_i32 = arith.constant 0 : i32
    %c0_i32_0 = arith.constant 0 : i32
    %c0_i32_1 = arith.constant 0 : i32
    return %c0_i32, %c0_i32_0 : i32, i32
  }
  func.func @transform_4(%arg0: i32, %arg1: i32) -> (i32, i32, i32) {
    %c0_i32 = arith.constant 0 : i32
    %c0_i32_0 = arith.constant 0 : i32
    return %arg0, %c0_i32, %arg1 : i32, i32, i32
  }
}

</mosaic_0001>

<llo_original>
// kernel: fno_layer_forward.2
$region0: #{fno_layer_forward.2}
  #allocation0 [shape = 'u32[]', space=smem, size = 0x4, offset = 0x4, fixed_abs, tag = 'smem constant byte address 0x4 - core index']
  #allocation1 [shape = 'u32[72,128]{1,0:T(1,128)}', space=vmem, size = 0x9000, scoped, tag = 'internal scratch']
  %s0 = inlined_call_operand.vmem [shape: bf16[32,2,8], index: 0, kind: input, shape index: {}]
  %s1 = inlined_call_operand.vmem [shape: bf16[32,2,8], index: 1, kind: input, shape index: {}]
  %s2 = inlined_call_operand.vmem [shape: bf16[32,8,128], index: 2, kind: input, shape index: {}]
  %s3 = inlined_call_operand.vmem [shape: f32[32,2,128], index: 3, kind: output, shape index: {}]
  %s4 = sld [smem:[#allocation0]]
  $region22: #{fno_layer_forward.2} parent=0
    _
  %s6 = ssub.s32 1, %s4
  %s7 = scalar_select 0, %s6, %s4
  // Predicated region
  $region2: #{fno_layer_forward.2} parent=0 // pred_check
    _
  $region3: #{fno_layer_forward.2} parent=0 // pred_check_branch
    %9 = sbr.rel (0) target = $region5
  $region4: #{fno_layer_forward.2} parent=0 // pred_region
    _
  $region5: #{fno_layer_forward.2} parent=0 // pred_fallthru
    _
  // Predicated region
  $region6: #{fno_layer_forward.2} parent=0 // pred_check
    _
  $region7: #{fno_layer_forward.2} parent=0 // pred_check_branch
    %11 = sbr.rel (0) target = $region9
  $region8: #{fno_layer_forward.2} parent=0 // pred_region
    _
  $region9: #{fno_layer_forward.2} parent=0 // pred_fallthru
    _
  // Predicated region
  $region10: #{fno_layer_forward.2} parent=0 // pred_check
    _
  $region11: #{fno_layer_forward.2} parent=0 // pred_check_branch
    %13 = sbr.rel (0) target = $region13
  $region12: #{fno_layer_forward.2} parent=0 // pred_region
    _
  $region13: #{fno_layer_forward.2} parent=0 // pred_fallthru
    _
  %v15 = vld [vmem:[%s0] sm:$0x1]
  %v16 = vld [vmem:[%s0 + $0x1] sm:$0x1]
  %v17 = vld [vmem:[%s0 + $0x2] sm:$0x1]
  %v18 = vld [vmem:[%s0 + $0x3] sm:$0x1]
  %v19 = vld [vmem:[%s0 + $0x4] sm:$0x1]
  %v20 = vld [vmem:[%s0 + $0x5] sm:$0x1]
  %v21 = vld [vmem:[%s0 + $0x6] sm:$0x1]
  %v22 = vld [vmem:[%s0 + $0x7] sm:$0x1]
  %v23 = vld [vmem:[%s0 + $0x8] sm:$0x1]
  %v24 = vld [vmem:[%s0 + $0x9] sm:$0x1]
  %v25 = vld [vmem:[%s0 + $0xa] sm:$0x1]
  %v26 = vld [vmem:[%s0 + $0xb] sm:$0x1]
  %v27 = vld [vmem:[%s0 + $0xc] sm:$0x1]
  %v28 = vld [vmem:[%s0 + $0xd] sm:$0x1]
  %v29 = vld [vmem:[%s0 + $0xe] sm:$0x1]
  %v30 = vld [vmem:[%s0 + $0xf] sm:$0x1]
  %v31 = vld [vmem:[%s0 + $0x10] sm:$0x1]
  %v32 = vld [vmem:[%s0 + $0x11] sm:$0x1]
  %v33 = vld [vmem:[%s0 + $0x12] sm:$0x1]
  %v34 = vld [vmem:[%s0 + $0x13] sm:$0x1]
  %v35 = vld [vmem:[%s0 + $0x14] sm:$0x1]
  %v36 = vld [vmem:[%s0 + $0x15] sm:$0x1]
  %v37 = vld [vmem:[%s0 + $0x16] sm:$0x1]
  %v38 = vld [vmem:[%s0 + $0x17] sm:$0x1]
  %v39 = vld [vmem:[%s0 + $0x18] sm:$0x1]
  %v40 = vld [vmem:[%s0 + $0x19] sm:$0x1]
  %v41 = vld [vmem:[%s0 + $0x1a] sm:$0x1]
  %v42 = vld [vmem:[%s0 + $0x1b] sm:$0x1]
  %v43 = vld [vmem:[%s0 + $0x1c] sm:$0x1]
  %v44 = vld [vmem:[%s0 + $0x1d] sm:$0x1]
  %v45 = vld [vmem:[%s0 + $0x1e] sm:$0x1]
  %v46 = vld [vmem:[%s0 + $0x1f] sm:$0x1]
  %v47 = vld [vmem:[%s1] sm:$0x1]
  %v48 = vld [vmem:[%s1 + $0x1] sm:$0x1]
  %v49 = vld [vmem:[%s1 + $0x2] sm:$0x1]
  %v50 = vld [vmem:[%s1 + $0x3] sm:$0x1]
  %v51 = vld [vmem:[%s1 + $0x4] sm:$0x1]
  %v52 = vld [vmem:[%s1 + $0x5] sm:$0x1]
  %v53 = vld [vmem:[%s1 + $0x6] sm:$0x1]
  %v54 = vld [vmem:[%s1 + $0x7] sm:$0x1]
  %v55 = vld [vmem:[%s1 + $0x8] sm:$0x1]
  %v56 = vld [vmem:[%s1 + $0x9] sm:$0x1]
  %v57 = vld [vmem:[%s1 + $0xa] sm:$0x1]
  %v58 = vld [vmem:[%s1 + $0xb] sm:$0x1]
  %v59 = vld [vmem:[%s1 + $0xc] sm:$0x1]
  %v60 = vld [vmem:[%s1 + $0xd] sm:$0x1]
  %v61 = vld [vmem:[%s1 + $0xe] sm:$0x1]
  %v62 = vld [vmem:[%s1 + $0xf] sm:$0x1]
  %v63 = vld [vmem:[%s1 + $0x10] sm:$0x1]
  %v64 = vld [vmem:[%s1 + $0x11] sm:$0x1]
  %v65 = vld [vmem:[%s1 + $0x12] sm:$0x1]
  %v66 = vld [vmem:[%s1 + $0x13] sm:$0x1]
  %v67 = vld [vmem:[%s1 + $0x14] sm:$0x1]
  %v68 = vld [vmem:[%s1 + $0x15] sm:$0x1]
  %v69 = vld [vmem:[%s1 + $0x16] sm:$0x1]
  %v70 = vld [vmem:[%s1 + $0x17] sm:$0x1]
  %v71 = vld [vmem:[%s1 + $0x18] sm:$0x1]
  %v72 = vld [vmem:[%s1 + $0x19] sm:$0x1]
  %v73 = vld [vmem:[%s1 + $0x1a] sm:$0x1]
  %v74 = vld [vmem:[%s1 + $0x1b] sm:$0x1]
  %v75 = vld [vmem:[%s1 + $0x1c] sm:$0x1]
  %v76 = vld [vmem:[%s1 + $0x1d] sm:$0x1]
  %v77 = vld [vmem:[%s1 + $0x1e] sm:$0x1]
  %v78 = vld [vmem:[%s1 + $0x1f] sm:$0x1]
  %v79 = vld [vmem:[%s2] sm:$0xf]
  %v80 = vld [vmem:[%s2 + $0x4] sm:$0xf]
  %v81 = vld [vmem:[%s2 + $0x8] sm:$0xf]
  %v82 = vld [vmem:[%s2 + $0xc] sm:$0xf]
  %v83 = vld [vmem:[%s2 + $0x10] sm:$0xf]
  %v84 = vld [vmem:[%s2 + $0x14] sm:$0xf]
  %v85 = vld [vmem:[%s2 + $0x18] sm:$0xf]
  %v86 = vld [vmem:[%s2 + $0x1c] sm:$0xf]
  %v87 = vld [vmem:[%s2 + $0x20] sm:$0xf]
  %v88 = vld [vmem:[%s2 + $0x24] sm:$0xf]
  %v89 = vld [vmem:[%s2 + $0x28] sm:$0xf]
  %v90 = vld [vmem:[%s2 + $0x2c] sm:$0xf]
  %v91 = vld [vmem:[%s2 + $0x30] sm:$0xf]
  %v92 = vld [vmem:[%s2 + $0x34] sm:$0xf]
  %v93 = vld [vmem:[%s2 + $0x38] sm:$0xf]
  %v94 = vld [vmem:[%s2 + $0x3c] sm:$0xf]
  %v95 = vld [vmem:[%s2 + $0x40] sm:$0xf]
  %v96 = vld [vmem:[%s2 + $0x44] sm:$0xf]
  %v97 = vld [vmem:[%s2 + $0x48] sm:$0xf]
  %v98 = vld [vmem:[%s2 + $0x4c] sm:$0xf]
  %v99 = vld [vmem:[%s2 + $0x50] sm:$0xf]
  %v100 = vld [vmem:[%s2 + $0x54] sm:$0xf]
  %v101 = vld [vmem:[%s2 + $0x58] sm:$0xf]
  %v102 = vld [vmem:[%s2 + $0x5c] sm:$0xf]
  %v103 = vld [vmem:[%s2 + $0x60] sm:$0xf]
  %v104 = vld [vmem:[%s2 + $0x64] sm:$0xf]
  %v105 = vld [vmem:[%s2 + $0x68] sm:$0xf]
  %v106 = vld [vmem:[%s2 + $0x6c] sm:$0xf]
  %v107 = vld [vmem:[%s2 + $0x70] sm:$0xf]
  %v108 = vld [vmem:[%s2 + $0x74] sm:$0xf]
  %v109 = vld [vmem:[%s2 + $0x78] sm:$0xf]
  %v110 = vld [vmem:[%s2 + $0x7c] sm:$0xf]
  %vm111 = vcmask 64512
  %v113 = vsel %vm111, %v15, 0
  %vm115 = vcmask 1043456
  %v117 = vsel %vm115, %v79, 0
  %119 = vmatpush.bf16.msra.mxu0 0
  %120 = vmatpush.bf16.msra.mxu0 0
  %121 = vmatpush.bf16.msra.mxu0 0
  %122 = vmatpush.bf16.msra.mxu0 0
  %123 = vmatpush.bf16.msra.mxu0 0
  %124 = vmatpush.bf16.msra.mxu0 0
  %125 = vmatpush.bf16.msra.mxu0 0
  %126 = vmatpush.bf16.msra.mxu0 %v117
  %127 = vmatmul.bf16.gmra.mxu0 %v113
  %v128 = vpop.f32.mrf.mxu0
  %v129 = vadd.f32 0.0, %v128
  %v130 = vpop.f32.mrf.mxu0
  %131 = vdwg.mxu0
  %v133 = vsel %vm111, %v16, 0
  %v136 = vsel %vm115, %v80, 0
  %138 = vmatpush.bf16.msra.mxu0 0
  %139 = vmatpush.bf16.msra.mxu0 0
  %140 = vmatpush.bf16.msra.mxu0 0
  %141 = vmatpush.bf16.msra.mxu0 0
  %142 = vmatpush.bf16.msra.mxu0 0
  %143 = vmatpush.bf16.msra.mxu0 0
  %144 = vmatpush.bf16.msra.mxu0 0
  %145 = vmatpush.bf16.msra.mxu0 %v136
  %146 = vmatmul.bf16.gmra.mxu0 %v133
  %v147 = vpop.f32.mrf.mxu0
  %v148 = vadd.f32 0.0, %v147
  %v149 = vpop.f32.mrf.mxu0
  %150 = vdwg.mxu0
  %v152 = vsel %vm111, %v17, 0
  %v155 = vsel %vm115, %v81, 0
  %157 = vmatpush.bf16.msra.mxu0 0
  %158 = vmatpush.bf16.msra.mxu0 0
  %159 = vmatpush.bf16.msra.mxu0 0
  %160 = vmatpush.bf16.msra.mxu0 0
  %161 = vmatpush.bf16.msra.mxu0 0
  %162 = vmatpush.bf16.msra.mxu0 0
  %163 = vmatpush.bf16.msra.mxu0 0
  %164 = vmatpush.bf16.msra.mxu0 %v155
  %165 = vmatmul.bf16.gmra.mxu0 %v152
  %v166 = vpop.f32.mrf.mxu0
  %v167 = vadd.f32 0.0, %v166
  %v168 = vpop.f32.mrf.mxu0
  %169 = vdwg.mxu0
  %v171 = vsel %vm111, %v18, 0
  %v174 = vsel %vm115, %v82, 0
  %176 = vmatpush.bf16.msra.mxu0 0
  %177 = vmatpush.bf16.msra.mxu0 0
  %178 = vmatpush.bf16.msra.mxu0 0
  %179 = vmatpush.bf16.msra.mxu0 0
  %180 = vmatpush.bf16.msra.mxu0 0
  %181 = vmatpush.bf16.msra.mxu0 0
  %182 = vmatpush.bf16.msra.mxu0 0
  %183 = vmatpush.bf16.msra.mxu0 %v174
  %184 = vmatmul.bf16.gmra.mxu0 %v171
  %v185 = vpop.f32.mrf.mxu0
  %v186 = vadd.f32 0.0, %v185
  %v187 = vpop.f32.mrf.mxu0
  %188 = vdwg.mxu0
  %v190 = vsel %vm111, %v19, 0
  %v193 = vsel %vm115, %v83, 0
  %195 = vmatpush.bf16.msra.mxu0 0
  %196 = vmatpush.bf16.msra.mxu0 0
  %197 = vmatpush.bf16.msra.mxu0 0
  %198 = vmatpush.bf16.msra.mxu0 0
  %199 = vmatpush.bf16.msra.mxu0 0
  %200 = vmatpush.bf16.msra.mxu0 0
  %201 = vmatpush.bf16.msra.mxu0 0
  %202 = vmatpush.bf16.msra.mxu0 %v193
  %203 = vmatmul.bf16.gmra.mxu0 %v190
  %v204 = vpop.f32.mrf.mxu0
  %v205 = vadd.f32 0.0, %v204
  %v206 = vpop.f32.mrf.mxu0
  %207 = vdwg.mxu0
  %v209 = vsel %vm111, %v20, 0
  %v212 = vsel %vm115, %v84, 0
  %214 = vmatpush.bf16.msra.mxu0 0
  %215 = vmatpush.bf16.msra.mxu0 0
  %216 = vmatpush.bf16.msra.mxu0 0
  %217 = vmatpush.bf16.msra.mxu0 0
  %218 = vmatpush.bf16.msra.mxu0 0
  %219 = vmatpush.bf16.msra.mxu0 0
  %220 = vmatpush.bf16.msra.mxu0 0
  %221 = vmatpush.bf16.msra.mxu0 %v212
  %222 = vmatmul.bf16.gmra.mxu0 %v209
  %v223 = vpop.f32.mrf.mxu0
  %v224 = vadd.f32 0.0, %v223
  %v225 = vpop.f32.mrf.mxu0
  %226 = vdwg.mxu0
  %v228 = vsel %vm111, %v21, 0
  %v231 = vsel %vm115, %v85, 0
  %233 = vmatpush.bf16.msra.mxu0 0
  %234 = vmatpush.bf16.msra.mxu0 0
  %235 = vmatpush.bf16.msra.mxu0 0
  %236 = vmatpush.bf16.msra.mxu0 0
  %237 = vmatpush.bf16.msra.mxu0 0
  %238 = vmatpush.bf16.msra.mxu0 0
  %239 = vmatpush.bf16.msra.mxu0 0
  %240 = vmatpush.bf16.msra.mxu0 %v231
  %241 = vmatmul.bf16.gmra.mxu0 %v228
  %v242 = vpop.f32.mrf.mxu0
  %v243 = vadd.f32 0.0, %v242
  %v244 = vpop.f32.mrf.mxu0
  %245 = vdwg.mxu0
  %v247 = vsel %vm111, %v22, 0
  %v250 = vsel %vm115, %v86, 0
  %252 = vmatpush.bf16.msra.mxu0 0
  %253 = vmatpush.bf16.msra.mxu0 0
  %254 = vmatpush.bf16.msra.mxu0 0
  %255 = vmatpush.bf16.msra.mxu0 0
  %256 = vmatpush.bf16.msra.mxu0 0
  %257 = vmatpush.bf16.msra.mxu0 0
  %258 = vmatpush.bf16.msra.mxu0 0
  %259 = vmatpush.bf16.msra.mxu0 %v250
  %260 = vmatmul.bf16.gmra.mxu0 %v247
  %v261 = vpop.f32.mrf.mxu0
  %v262 = vadd.f32 0.0, %v261
  %v263 = vpop.f32.mrf.mxu0
  %264 = vdwg.mxu0
  %v266 = vsel %vm111, %v23, 0
  %v269 = vsel %vm115, %v87, 0
  %271 = vmatpush.bf16.msra.mxu0 0
  %272 = vmatpush.bf16.msra.mxu0 0
  %273 = vmatpush.bf16.msra.mxu0 0
  %274 = vmatpush.bf16.msra.mxu0 0
  %275 = vmatpush.bf16.msra.mxu0 0
  %276 = vmatpush.bf16.msra.mxu0 0
  %277 = vmatpush.bf16.msra.mxu0 0
  %278 = vmatpush.bf16.msra.mxu0 %v269
  %279 = vmatmul.bf16.gmra.mxu0 %v266
  %v280 = vpop.f32.mrf.mxu0
  %v281 = vadd.f32 0.0, %v280
  %v282 = vpop.f32.mrf.mxu0
  %283 = vdwg.mxu0
  %v285 = vsel %vm111, %v24, 0
  %v288 = vsel %vm115, %v88, 0
  %290 = vmatpush.bf16.msra.mxu0 0
  %291 = vmatpush.bf16.msra.mxu0 0
  %292 = vmatpush.bf16.msra.mxu0 0
  %293 = vmatpush.bf16.msra.mxu0 0
  %294 = vmatpush.bf16.msra.mxu0 0
  %295 = vmatpush.bf16.msra.mxu0 0
  %296 = vmatpush.bf16.msra.mxu0 0
  %297 = vmatpush.bf16.msra.mxu0 %v288
  %298 = vmatmul.bf16.gmra.mxu0 %v285
  %v299 = vpop.f32.mrf.mxu0
  %v300 = vadd.f32 0.0, %v299
  %v301 = vpop.f32.mrf.mxu0
  %302 = vdwg.mxu0
  %v304 = vsel %vm111, %v25, 0
  %v307 = vsel %vm115, %v89, 0
  %309 = vmatpush.bf16.msra.mxu0 0
  %310 = vmatpush.bf16.msra.mxu0 0
  %311 = vmatpush.bf16.msra.mxu0 0
  %312 = vmatpush.bf16.msra.mxu0 0
  %313 = vmatpush.bf16.msra.mxu0 0
  %314 = vmatpush.bf16.msra.mxu0 0
  %315 = vmatpush.bf16.msra.mxu0 0
  %316 = vmatpush.bf16.msra.mxu0 %v307
  %317 = vmatmul.bf16.gmra.mxu0 %v304
  %v318 = vpop.f32.mrf.mxu0
  %v319 = vadd.f32 0.0, %v318
  %v320 = vpop.f32.mrf.mxu0
  %321 = vdwg.mxu0
  %v323 = vsel %vm111, %v26, 0
  %v326 = vsel %vm115, %v90, 0
  %328 = vmatpush.bf16.msra.mxu0 0
  %329 = vmatpush.bf16.msra.mxu0 0
  %330 = vmatpush.bf16.msra.mxu0 0
  %331 = vmatpush.bf16.msra.mxu0 0
  %332 = vmatpush.bf16.msra.mxu0 0
  %333 = vmatpush.bf16.msra.mxu0 0
  %334 = vmatpush.bf16.msra.mxu0 0
  %335 = vmatpush.bf16.msra.mxu0 %v326
  %336 = vmatmul.bf16.gmra.mxu0 %v323
  %v337 = vpop.f32.mrf.mxu0
  %v338 = vadd.f32 0.0, %v337
  %v339 = vpop.f32.mrf.mxu0
  %340 = vdwg.mxu0
  %v342 = vsel %vm111, %v27, 0
  %v345 = vsel %vm115, %v91, 0
  %347 = vmatpush.bf16.msra.mxu0 0
  %348 = vmatpush.bf16.msra.mxu0 0
  %349 = vmatpush.bf16.msra.mxu0 0
  %350 = vmatpush.bf16.msra.mxu0 0
  %351 = vmatpush.bf16.msra.mxu0 0
  %352 = vmatpush.bf16.msra.mxu0 0
  %353 = vmatpush.bf16.msra.mxu0 0
  %354 = vmatpush.bf16.msra.mxu0 %v345
  %355 = vmatmul.bf16.gmra.mxu0 %v342
  %v356 = vpop.f32.mrf.mxu0
  %v357 = vadd.f32 0.0, %v356
  %v358 = vpop.f32.mrf.mxu0
  %359 = vdwg.mxu0
  %v361 = vsel %vm111, %v28, 0
  %v364 = vsel %vm115, %v92, 0
  %366 = vmatpush.bf16.msra.mxu0 0
  %367 = vmatpush.bf16.msra.mxu0 0
  %368 = vmatpush.bf16.msra.mxu0 0
  %369 = vmatpush.bf16.msra.mxu0 0
  %370 = vmatpush.bf16.msra.mxu0 0
  %371 = vmatpush.bf16.msra.mxu0 0
  %372 = vmatpush.bf16.msra.mxu0 0
  %373 = vmatpush.bf16.msra.mxu0 %v364
  %374 = vmatmul.bf16.gmra.mxu0 %v361
  %v375 = vpop.f32.mrf.mxu0
  %v376 = vadd.f32 0.0, %v375
  %v377 = vpop.f32.mrf.mxu0
  %378 = vdwg.mxu0
  %v380 = vsel %vm111, %v29, 0
  %v383 = vsel %vm115, %v93, 0
  %385 = vmatpush.bf16.msra.mxu0 0
  %386 = vmatpush.bf16.msra.mxu0 0
  %387 = vmatpush.bf16.msra.mxu0 0
  %388 = vmatpush.bf16.msra.mxu0 0
  %389 = vmatpush.bf16.msra.mxu0 0
  %390 = vmatpush.bf16.msra.mxu0 0
  %391 = vmatpush.bf16.msra.mxu0 0
  %392 = vmatpush.bf16.msra.mxu0 %v383
  %393 = vmatmul.bf16.gmra.mxu0 %v380
  %v394 = vpop.f32.mrf.mxu0
  %v395 = vadd.f32 0.0, %v394
  %v396 = vpop.f32.mrf.mxu0
  %397 = vdwg.mxu0
  %v399 = vsel %vm111, %v30, 0
  %v402 = vsel %vm115, %v94, 0
  %404 = vmatpush.bf16.msra.mxu0 0
  %405 = vmatpush.bf16.msra.mxu0 0
  %406 = vmatpush.bf16.msra.mxu0 0
  %407 = vmatpush.bf16.msra.mxu0 0
  %408 = vmatpush.bf16.msra.mxu0 0
  %409 = vmatpush.bf16.msra.mxu0 0
  %410 = vmatpush.bf16.msra.mxu0 0
  %411 = vmatpush.bf16.msra.mxu0 %v402
  %412 = vmatmul.bf16.gmra.mxu0 %v399
  %v413 = vpop.f32.mrf.mxu0
  %v414 = vadd.f32 0.0, %v413
  %v415 = vpop.f32.mrf.mxu0
  %416 = vdwg.mxu0
  %v418 = vsel %vm111, %v31, 0
  %v421 = vsel %vm115, %v95, 0
  %423 = vmatpush.bf16.msra.mxu0 0
  %424 = vmatpush.bf16.msra.mxu0 0
  %425 = vmatpush.bf16.msra.mxu0 0
  %426 = vmatpush.bf16.msra.mxu0 0
  %427 = vmatpush.bf16.msra.mxu0 0
  %428 = vmatpush.bf16.msra.mxu0 0
  %429 = vmatpush.bf16.msra.mxu0 0
  %430 = vmatpush.bf16.msra.mxu0 %v421
  %431 = vmatmul.bf16.gmra.mxu0 %v418
  %v432 = vpop.f32.mrf.mxu0
  %v433 = vadd.f32 0.0, %v432
  %v434 = vpop.f32.mrf.mxu0
  %435 = vdwg.mxu0
  %v437 = vsel %vm111, %v32, 0
  %v440 = vsel %vm115, %v96, 0
  %442 = vmatpush.bf16.msra.mxu0 0
  %443 = vmatpush.bf16.msra.mxu0 0
  %444 = vmatpush.bf16.msra.mxu0 0
  %445 = vmatpush.bf16.msra.mxu0 0
  %446 = vmatpush.bf16.msra.mxu0 0
  %447 = vmatpush.bf16.msra.mxu0 0
  %448 = vmatpush.bf16.msra.mxu0 0
  %449 = vmatpush.bf16.msra.mxu0 %v440
  %450 = vmatmul.bf16.gmra.mxu0 %v437
  %v451 = vpop.f32.mrf.mxu0
  %v452 = vadd.f32 0.0, %v451
  %v453 = vpop.f32.mrf.mxu0
  %454 = vdwg.mxu0
  %v456 = vsel %vm111, %v33, 0
  %v459 = vsel %vm115, %v97, 0
  %461 = vmatpush.bf16.msra.mxu0 0
  %462 = vmatpush.bf16.msra.mxu0 0
  %463 = vmatpush.bf16.msra.mxu0 0
  %464 = vmatpush.bf16.msra.mxu0 0
  %465 = vmatpush.bf16.msra.mxu0 0
  %466 = vmatpush.bf16.msra.mxu0 0
  %467 = vmatpush.bf16.msra.mxu0 0
  %468 = vmatpush.bf16.msra.mxu0 %v459
  %469 = vmatmul.bf16.gmra.mxu0 %v456
  %v470 = vpop.f32.mrf.mxu0
  %v471 = vadd.f32 0.0, %v470
  %v472 = vpop.f32.mrf.mxu0
  %473 = vdwg.mxu0
  %v475 = vsel %vm111, %v34, 0
  %v478 = vsel %vm115, %v98, 0
  %480 = vmatpush.bf16.msra.mxu0 0
  %481 = vmatpush.bf16.msra.mxu0 0
  %482 = vmatpush.bf16.msra.mxu0 0
  %483 = vmatpush.bf16.msra.mxu0 0
  %484 = vmatpush.bf16.msra.mxu0 0
  %485 = vmatpush.bf16.msra.mxu0 0
  %486 = vmatpush.bf16.msra.mxu0 0
  %487 = vmatpush.bf16.msra.mxu0 %v478
  %488 = vmatmul.bf16.gmra.mxu0 %v475
  %v489 = vpop.f32.mrf.mxu0
  %v490 = vadd.f32 0.0, %v489
  %v491 = vpop.f32.mrf.mxu0
  %492 = vdwg.mxu0
  %v494 = vsel %vm111, %v35, 0
  %v497 = vsel %vm115, %v99, 0
  %499 = vmatpush.bf16.msra.mxu0 0
  %500 = vmatpush.bf16.msra.mxu0 0
  %501 = vmatpush.bf16.msra.mxu0 0
  %502 = vmatpush.bf16.msra.mxu0 0
  %503 = vmatpush.bf16.msra.mxu0 0
  %504 = vmatpush.bf16.msra.mxu0 0
  %505 = vmatpush.bf16.msra.mxu0 0
  %506 = vmatpush.bf16.msra.mxu0 %v497
  %507 = vmatmul.bf16.gmra.mxu0 %v494
  %v508 = vpop.f32.mrf.mxu0
  %v509 = vadd.f32 0.0, %v508
  %v510 = vpop.f32.mrf.mxu0
  %511 = vdwg.mxu0
  %v513 = vsel %vm111, %v36, 0
  %v516 = vsel %vm115, %v100, 0
  %518 = vmatpush.bf16.msra.mxu0 0
  %519 = vmatpush.bf16.msra.mxu0 0
  %520 = vmatpush.bf16.msra.mxu0 0
  %521 = vmatpush.bf16.msra.mxu0 0
  %522 = vmatpush.bf16.msra.mxu0 0
  %523 = vmatpush.bf16.msra.mxu0 0
  %524 = vmatpush.bf16.msra.mxu0 0
  %525 = vmatpush.bf16.msra.mxu0 %v516
  %526 = vmatmul.bf16.gmra.mxu0 %v513
  %v527 = vpop.f32.mrf.mxu0
  %v528 = vadd.f32 0.0, %v527
  %v529 = vpop.f32.mrf.mxu0
  %530 = vdwg.mxu0
  %v532 = vsel %vm111, %v37, 0
  %v535 = vsel %vm115, %v101, 0
  %537 = vmatpush.bf16.msra.mxu0 0
  %538 = vmatpush.bf16.msra.mxu0 0
  %539 = vmatpush.bf16.msra.mxu0 0
  %540 = vmatpush.bf16.msra.mxu0 0
  %541 = vmatpush.bf16.msra.mxu0 0
  %542 = vmatpush.bf16.msra.mxu0 0
  %543 = vmatpush.bf16.msra.mxu0 0
  %544 = vmatpush.bf16.msra.mxu0 %v535
  %545 = vmatmul.bf16.gmra.mxu0 %v532
  %v546 = vpop.f32.mrf.mxu0
  %v547 = vadd.f32 0.0, %v546
  %v548 = vpop.f32.mrf.mxu0
  %549 = vdwg.mxu0
  %v551 = vsel %vm111, %v38, 0
  %v554 = vsel %vm115, %v102, 0
  %556 = vmatpush.bf16.msra.mxu0 0
  %557 = vmatpush.bf16.msra.mxu0 0
  %558 = vmatpush.bf16.msra.mxu0 0
  %559 = vmatpush.bf16.msra.mxu0 0
  %560 = vmatpush.bf16.msra.mxu0 0
  %561 = vmatpush.bf16.msra.mxu0 0
  %562 = vmatpush.bf16.msra.mxu0 0
  %563 = vmatpush.bf16.msra.mxu0 %v554
  %564 = vmatmul.bf16.gmra.mxu0 %v551
  %v565 = vpop.f32.mrf.mxu0
  %v566 = vadd.f32 0.0, %v565
  %v567 = vpop.f32.mrf.mxu0
  %568 = vdwg.mxu0
  %v570 = vsel %vm111, %v39, 0
  %v573 = vsel %vm115, %v103, 0
  %575 = vmatpush.bf16.msra.mxu0 0
  %576 = vmatpush.bf16.msra.mxu0 0
  %577 = vmatpush.bf16.msra.mxu0 0
  %578 = vmatpush.bf16.msra.mxu0 0
  %579 = vmatpush.bf16.msra.mxu0 0
  %580 = vmatpush.bf16.msra.mxu0 0
  %581 = vmatpush.bf16.msra.mxu0 0
  %582 = vmatpush.bf16.msra.mxu0 %v573
  %583 = vmatmul.bf16.gmra.mxu0 %v570
  %v584 = vpop.f32.mrf.mxu0
  %v585 = vadd.f32 0.0, %v584
  %v586 = vpop.f32.mrf.mxu0
  %587 = vdwg.mxu0
  %v589 = vsel %vm111, %v40, 0
  %v592 = vsel %vm115, %v104, 0
  %594 = vmatpush.bf16.msra.mxu0 0
  %595 = vmatpush.bf16.msra.mxu0 0
  %596 = vmatpush.bf16.msra.mxu0 0
  %597 = vmatpush.bf16.msra.mxu0 0
  %598 = vmatpush.bf16.msra.mxu0 0
  %599 = vmatpush.bf16.msra.mxu0 0
  %600 = vmatpush.bf16.msra.mxu0 0
  %601 = vmatpush.bf16.msra.mxu0 %v592
  %602 = vmatmul.bf16.gmra.mxu0 %v589
  %v603 = vpop.f32.mrf.mxu0
  %v604 = vadd.f32 0.0, %v603
  %v605 = vpop.f32.mrf.mxu0
  %606 = vdwg.mxu0
  %v608 = vsel %vm111, %v41, 0
  %v611 = vsel %vm115, %v105, 0
  %613 = vmatpush.bf16.msra.mxu0 0
  %614 = vmatpush.bf16.msra.mxu0 0
  %615 = vmatpush.bf16.msra.mxu0 0
  %616 = vmatpush.bf16.msra.mxu0 0
  %617 = vmatpush.bf16.msra.mxu0 0
  %618 = vmatpush.bf16.msra.mxu0 0
  %619 = vmatpush.bf16.msra.mxu0 0
  %620 = vmatpush.bf16.msra.mxu0 %v611
  %621 = vmatmul.bf16.gmra.mxu0 %v608
  %v622 = vpop.f32.mrf.mxu0
  %v623 = vadd.f32 0.0, %v622
  %v624 = vpop.f32.mrf.mxu0
  %625 = vdwg.mxu0
  %v627 = vsel %vm111, %v42, 0
  %v630 = vsel %vm115, %v106, 0
  %632 = vmatpush.bf16.msra.mxu0 0
  %633 = vmatpush.bf16.msra.mxu0 0
  %634 = vmatpush.bf16.msra.mxu0 0
  %635 = vmatpush.bf16.msra.mxu0 0
  %636 = vmatpush.bf16.msra.mxu0 0
  %637 = vmatpush.bf16.msra.mxu0 0
  %638 = vmatpush.bf16.msra.mxu0 0
  %639 = vmatpush.bf16.msra.mxu0 %v630
  %640 = vmatmul.bf16.gmra.mxu0 %v627
  %v641 = vpop.f32.mrf.mxu0
  %v642 = vadd.f32 0.0, %v641
  %v643 = vpop.f32.mrf.mxu0
  %644 = vdwg.mxu0
  %v646 = vsel %vm111, %v43, 0
  %v649 = vsel %vm115, %v107, 0
  %651 = vmatpush.bf16.msra.mxu0 0
  %652 = vmatpush.bf16.msra.mxu0 0
  %653 = vmatpush.bf16.msra.mxu0 0
  %654 = vmatpush.bf16.msra.mxu0 0
  %655 = vmatpush.bf16.msra.mxu0 0
  %656 = vmatpush.bf16.msra.mxu0 0
  %657 = vmatpush.bf16.msra.mxu0 0
  %658 = vmatpush.bf16.msra.mxu0 %v649
  %659 = vmatmul.bf16.gmra.mxu0 %v646
  %v660 = vpop.f32.mrf.mxu0
  %v661 = vadd.f32 0.0, %v660
  %v662 = vpop.f32.mrf.mxu0
  %663 = vdwg.mxu0
  %v665 = vsel %vm111, %v44, 0
  %v668 = vsel %vm115, %v108, 0
  %670 = vmatpush.bf16.msra.mxu0 0
  %671 = vmatpush.bf16.msra.mxu0 0
  %672 = vmatpush.bf16.msra.mxu0 0
  %673 = vmatpush.bf16.msra.mxu0 0
  %674 = vmatpush.bf16.msra.mxu0 0
  %675 = vmatpush.bf16.msra.mxu0 0
  %676 = vmatpush.bf16.msra.mxu0 0
  %677 = vmatpush.bf16.msra.mxu0 %v668
  %678 = vmatmul.bf16.gmra.mxu0 %v665
  %v679 = vpop.f32.mrf.mxu0
  %v680 = vadd.f32 0.0, %v679
  %v681 = vpop.f32.mrf.mxu0
  %682 = vdwg.mxu0
  %v684 = vsel %vm111, %v45, 0
  %v687 = vsel %vm115, %v109, 0
  %689 = vmatpush.bf16.msra.mxu0 0
  %690 = vmatpush.bf16.msra.mxu0 0
  %691 = vmatpush.bf16.msra.mxu0 0
  %692 = vmatpush.bf16.msra.mxu0 0
  %693 = vmatpush.bf16.msra.mxu0 0
  %694 = vmatpush.bf16.msra.mxu0 0
  %695 = vmatpush.bf16.msra.mxu0 0
  %696 = vmatpush.bf16.msra.mxu0 %v687
  %697 = vmatmul.bf16.gmra.mxu0 %v684
  %v698 = vpop.f32.mrf.mxu0
  %v699 = vadd.f32 0.0, %v698
  %v700 = vpop.f32.mrf.mxu0
  %701 = vdwg.mxu0
  %v703 = vsel %vm111, %v46, 0
  %v706 = vsel %vm115, %v110, 0
  %708 = vmatpush.bf16.msra.mxu0 0
  %709 = vmatpush.bf16.msra.mxu0 0
  %710 = vmatpush.bf16.msra.mxu0 0
  %711 = vmatpush.bf16.msra.mxu0 0
  %712 = vmatpush.bf16.msra.mxu0 0
  %713 = vmatpush.bf16.msra.mxu0 0
  %714 = vmatpush.bf16.msra.mxu0 0
  %715 = vmatpush.bf16.msra.mxu0 %v706
  %716 = vmatmul.bf16.gmra.mxu0 %v703
  %v717 = vpop.f32.mrf.mxu0
  %v718 = vadd.f32 0.0, %v717
  %v719 = vpop.f32.mrf.mxu0
  %720 = vdwg.mxu0
  %v722 = vsel %vm111, %v47, 0
  %724 = vmatpush.bf16.msra.mxu0 0
  %725 = vmatpush.bf16.msra.mxu0 0
  %726 = vmatpush.bf16.msra.mxu0 0
  %727 = vmatpush.bf16.msra.mxu0 0
  %728 = vmatpush.bf16.msra.mxu0 0
  %729 = vmatpush.bf16.msra.mxu0 0
  %730 = vmatpush.bf16.msra.mxu0 0
  %731 = vmatpush.bf16.msra.mxu0 %v117
  %732 = vmatmul.bf16.gmra.mxu0 %v722
  %v733 = vpop.f32.mrf.mxu0
  %v734 = vadd.f32 0.0, %v733
  %v735 = vpop.f32.mrf.mxu0
  %736 = vdwg.mxu0
  %v738 = vsel %vm111, %v48, 0
  %740 = vmatpush.bf16.msra.mxu0 0
  %741 = vmatpush.bf16.msra.mxu0 0
  %742 = vmatpush.bf16.msra.mxu0 0
  %743 = vmatpush.bf16.msra.mxu0 0
  %744 = vmatpush.bf16.msra.mxu0 0
  %745 = vmatpush.bf16.msra.mxu0 0
  %746 = vmatpush.bf16.msra.mxu0 0
  %747 = vmatpush.bf16.msra.mxu0 %v136
  %748 = vmatmul.bf16.gmra.mxu0 %v738
  %v749 = vpop.f32.mrf.mxu0
  %v750 = vadd.f32 0.0, %v749
  %v751 = vpop.f32.mrf.mxu0
  %752 = vdwg.mxu0
  %v754 = vsel %vm111, %v49, 0
  %756 = vmatpush.bf16.msra.mxu0 0
  %757 = vmatpush.bf16.msra.mxu0 0
  %758 = vmatpush.bf16.msra.mxu0 0
  %759 = vmatpush.bf16.msra.mxu0 0
  %760 = vmatpush.bf16.msra.mxu0 0
  %761 = vmatpush.bf16.msra.mxu0 0
  %762 = vmatpush.bf16.msra.mxu0 0
  %763 = vmatpush.bf16.msra.mxu0 %v155
  %764 = vmatmul.bf16.gmra.mxu0 %v754
  %v765 = vpop.f32.mrf.mxu0
  %v766 = vadd.f32 0.0, %v765
  %v767 = vpop.f32.mrf.mxu0
  %768 = vdwg.mxu0
  %v770 = vsel %vm111, %v50, 0
  %772 = vmatpush.bf16.msra.mxu0 0
  %773 = vmatpush.bf16.msra.mxu0 0
  %774 = vmatpush.bf16.msra.mxu0 0
  %775 = vmatpush.bf16.msra.mxu0 0
  %776 = vmatpush.bf16.msra.mxu0 0
  %777 = vmatpush.bf16.msra.mxu0 0
  %778 = vmatpush.bf16.msra.mxu0 0
  %779 = vmatpush.bf16.msra.mxu0 %v174
  %780 = vmatmul.bf16.gmra.mxu0 %v770
  %v781 = vpop.f32.mrf.mxu0
  %v782 = vadd.f32 0.0, %v781
  %v783 = vpop.f32.mrf.mxu0
  %784 = vdwg.mxu0
  %v786 = vsel %vm111, %v51, 0
  %788 = vmatpush.bf16.msra.mxu0 0
  %789 = vmatpush.bf16.msra.mxu0 0
  %790 = vmatpush.bf16.msra.mxu0 0
  %791 = vmatpush.bf16.msra.mxu0 0
  %792 = vmatpush.bf16.msra.mxu0 0
  %793 = vmatpush.bf16.msra.mxu0 0
  %794 = vmatpush.bf16.msra.mxu0 0
  %795 = vmatpush.bf16.msra.mxu0 %v193
  %796 = vmatmul.bf16.gmra.mxu0 %v786
  %v797 = vpop.f32.mrf.mxu0
  %v798 = vadd.f32 0.0, %v797
  %v799 = vpop.f32.mrf.mxu0
  %800 = vdwg.mxu0
  %v802 = vsel %vm111, %v52, 0
  %804 = vmatpush.bf16.msra.mxu0 0
  %805 = vmatpush.bf16.msra.mxu0 0
  %806 = vmatpush.bf16.msra.mxu0 0
  %807 = vmatpush.bf16.msra.mxu0 0
  %808 = vmatpush.bf16.msra.mxu0 0
  %809 = vmatpush.bf16.msra.mxu0 0
  %810 = vmatpush.bf16.msra.mxu0 0
  %811 = vmatpush.bf16.msra.mxu0 %v212
  %812 = vmatmul.bf16.gmra.mxu0 %v802
  %v813 = vpop.f32.mrf.mxu0
  %v814 = vadd.f32 0.0, %v813
  %v815 = vpop.f32.mrf.mxu0
  %816 = vdwg.mxu0
  %v818 = vsel %vm111, %v53, 0
  %820 = vmatpush.bf16.msra.mxu0 0
  %821 = vmatpush.bf16.msra.mxu0 0
  %822 = vmatpush.bf16.msra.mxu0 0
  %823 = vmatpush.bf16.msra.mxu0 0
  %824 = vmatpush.bf16.msra.mxu0 0
  %825 = vmatpush.bf16.msra.mxu0 0
  %826 = vmatpush.bf16.msra.mxu0 0
  %827 = vmatpush.bf16.msra.mxu0 %v231
  %828 = vmatmul.bf16.gmra.mxu0 %v818
  %v829 = vpop.f32.mrf.mxu0
  %v830 = vadd.f32 0.0, %v829
  %v831 = vpop.f32.mrf.mxu0
  %832 = vdwg.mxu0
  %v834 = vsel %vm111, %v54, 0
  %836 = vmatpush.bf16.msra.mxu0 0
  %837 = vmatpush.bf16.msra.mxu0 0
  %838 = vmatpush.bf16.msra.mxu0 0
  %839 = vmatpush.bf16.msra.mxu0 0
  %840 = vmatpush.bf16.msra.mxu0 0
  %841 = vmatpush.bf16.msra.mxu0 0
  %842 = vmatpush.bf16.msra.mxu0 0
  %843 = vmatpush.bf16.msra.mxu0 %v250
  %844 = vmatmul.bf16.gmra.mxu0 %v834
  %v845 = vpop.f32.mrf.mxu0
  %v846 = vadd.f32 0.0, %v845
  %v847 = vpop.f32.mrf.mxu0
  %848 = vdwg.mxu0
  %v850 = vsel %vm111, %v55, 0
  %852 = vmatpush.bf16.msra.mxu0 0
  %853 = vmatpush.bf16.msra.mxu0 0
  %854 = vmatpush.bf16.msra.mxu0 0
  %855 = vmatpush.bf16.msra.mxu0 0
  %856 = vmatpush.bf16.msra.mxu0 0
  %857 = vmatpush.bf16.msra.mxu0 0
  %858 = vmatpush.bf16.msra.mxu0 0
  %859 = vmatpush.bf16.msra.mxu0 %v269
  %860 = vmatmul.bf16.gmra.mxu0 %v850
  %v861 = vpop.f32.mrf.mxu0
  %v862 = vadd.f32 0.0, %v861
  %v863 = vpop.f32.mrf.mxu0
  %864 = vdwg.mxu0
  %v866 = vsel %vm111, %v56, 0
  %868 = vmatpush.bf16.msra.mxu0 0
  %869 = vmatpush.bf16.msra.mxu0 0
  %870 = vmatpush.bf16.msra.mxu0 0
  %871 = vmatpush.bf16.msra.mxu0 0
  %872 = vmatpush.bf16.msra.mxu0 0
  %873 = vmatpush.bf16.msra.mxu0 0
  %874 = vmatpush.bf16.msra.mxu0 0
  %875 = vmatpush.bf16.msra.mxu0 %v288
  %876 = vmatmul.bf16.gmra.mxu0 %v866
  %v877 = vpop.f32.mrf.mxu0
  %v878 = vadd.f32 0.0, %v877
  %v879 = vpop.f32.mrf.mxu0
  %880 = vdwg.mxu0
  %v882 = vsel %vm111, %v57, 0
  %884 = vmatpush.bf16.msra.mxu0 0
  %885 = vmatpush.bf16.msra.mxu0 0
  %886 = vmatpush.bf16.msra.mxu0 0
  %887 = vmatpush.bf16.msra.mxu0 0
  %888 = vmatpush.bf16.msra.mxu0 0
  %889 = vmatpush.bf16.msra.mxu0 0
  %890 = vmatpush.bf16.msra.mxu0 0
  %891 = vmatpush.bf16.msra.mxu0 %v307
  %892 = vmatmul.bf16.gmra.mxu0 %v882
  %v893 = vpop.f32.mrf.mxu0
  %v894 = vadd.f32 0.0, %v893
  %v895 = vpop.f32.mrf.mxu0
  %896 = vdwg.mxu0
  %v898 = vsel %vm111, %v58, 0
  %900 = vmatpush.bf16.msra.mxu0 0
  %901 = vmatpush.bf16.msra.mxu0 0
  %902 = vmatpush.bf16.msra.mxu0 0
  %903 = vmatpush.bf16.msra.mxu0 0
  %904 = vmatpush.bf16.msra.mxu0 0
  %905 = vmatpush.bf16.msra.mxu0 0
  %906 = vmatpush.bf16.msra.mxu0 0
  %907 = vmatpush.bf16.msra.mxu0 %v326
  %908 = vmatmul.bf16.gmra.mxu0 %v898
  %v909 = vpop.f32.mrf.mxu0
  %v910 = vadd.f32 0.0, %v909
  %v911 = vpop.f32.mrf.mxu0
  %912 = vdwg.mxu0
  %v914 = vsel %vm111, %v59, 0
  %916 = vmatpush.bf16.msra.mxu0 0
  %917 = vmatpush.bf16.msra.mxu0 0
  %918 = vmatpush.bf16.msra.mxu0 0
  %919 = vmatpush.bf16.msra.mxu0 0
  %920 = vmatpush.bf16.msra.mxu0 0
  %921 = vmatpush.bf16.msra.mxu0 0
  %922 = vmatpush.bf16.msra.mxu0 0
  %923 = vmatpush.bf16.msra.mxu0 %v345
  %924 = vmatmul.bf16.gmra.mxu0 %v914
  %v925 = vpop.f32.mrf.mxu0
  %v926 = vadd.f32 0.0, %v925
  %v927 = vpop.f32.mrf.mxu0
  %928 = vdwg.mxu0
  %v930 = vsel %vm111, %v60, 0
  %932 = vmatpush.bf16.msra.mxu0 0
  %933 = vmatpush.bf16.msra.mxu0 0
  %934 = vmatpush.bf16.msra.mxu0 0
  %935 = vmatpush.bf16.msra.mxu0 0
  %936 = vmatpush.bf16.msra.mxu0 0
  %937 = vmatpush.bf16.msra.mxu0 0
  %938 = vmatpush.bf16.msra.mxu0 0
  %939 = vmatpush.bf16.msra.mxu0 %v364
  %940 = vmatmul.bf16.gmra.mxu0 %v930
  %v941 = vpop.f32.mrf.mxu0
  %v942 = vadd.f32 0.0, %v941
  %v943 = vpop.f32.mrf.mxu0
  %944 = vdwg.mxu0
  %v946 = vsel %vm111, %v61, 0
  %948 = vmatpush.bf16.msra.mxu0 0
  %949 = vmatpush.bf16.msra.mxu0 0
  %950 = vmatpush.bf16.msra.mxu0 0
  %951 = vmatpush.bf16.msra.mxu0 0
  %952 = vmatpush.bf16.msra.mxu0 0
  %953 = vmatpush.bf16.msra.mxu0 0
  %954 = vmatpush.bf16.msra.mxu0 0
  %955 = vmatpush.bf16.msra.mxu0 %v383
  %956 = vmatmul.bf16.gmra.mxu0 %v946
  %v957 = vpop.f32.mrf.mxu0
  %v958 = vadd.f32 0.0, %v957
  %v959 = vpop.f32.mrf.mxu0
  %960 = vdwg.mxu0
  %v962 = vsel %vm111, %v62, 0
  %964 = vmatpush.bf16.msra.mxu0 0
  %965 = vmatpush.bf16.msra.mxu0 0
  %966 = vmatpush.bf16.msra.mxu0 0
  %967 = vmatpush.bf16.msra.mxu0 0
  %968 = vmatpush.bf16.msra.mxu0 0
  %969 = vmatpush.bf16.msra.mxu0 0
  %970 = vmatpush.bf16.msra.mxu0 0
  %971 = vmatpush.bf16.msra.mxu0 %v402
  %972 = vmatmul.bf16.gmra.mxu0 %v962
  %v973 = vpop.f32.mrf.mxu0
  %v974 = vadd.f32 0.0, %v973
  %v975 = vpop.f32.mrf.mxu0
  %976 = vdwg.mxu0
  %v978 = vsel %vm111, %v63, 0
  %980 = vmatpush.bf16.msra.mxu0 0
  %981 = vmatpush.bf16.msra.mxu0 0
  %982 = vmatpush.bf16.msra.mxu0 0
  %983 = vmatpush.bf16.msra.mxu0 0
  %984 = vmatpush.bf16.msra.mxu0 0
  %985 = vmatpush.bf16.msra.mxu0 0
  %986 = vmatpush.bf16.msra.mxu0 0
  %987 = vmatpush.bf16.msra.mxu0 %v421
  %988 = vmatmul.bf16.gmra.mxu0 %v978
  %v989 = vpop.f32.mrf.mxu0
  %v990 = vadd.f32 0.0, %v989
  %v991 = vpop.f32.mrf.mxu0
  %992 = vdwg.mxu0
  %v994 = vsel %vm111, %v64, 0
  %996 = vmatpush.bf16.msra.mxu0 0
  %997 = vmatpush.bf16.msra.mxu0 0
  %998 = vmatpush.bf16.msra.mxu0 0
  %999 = vmatpush.bf16.msra.mxu0 0
  %1000 = vmatpush.bf16.msra.mxu0 0
  %1001 = vmatpush.bf16.msra.mxu0 0
  %1002 = vmatpush.bf16.msra.mxu0 0
  %1003 = vmatpush.bf16.msra.mxu0 %v440
  %1004 = vmatmul.bf16.gmra.mxu0 %v994
  %v1005 = vpop.f32.mrf.mxu0
  %v1006 = vadd.f32 0.0, %v1005
  %v1007 = vpop.f32.mrf.mxu0
  %1008 = vdwg.mxu0
  %v1010 = vsel %vm111, %v65, 0
  %1012 = vmatpush.bf16.msra.mxu0 0
  %1013 = vmatpush.bf16.msra.mxu0 0
  %1014 = vmatpush.bf16.msra.mxu0 0
  %1015 = vmatpush.bf16.msra.mxu0 0
  %1016 = vmatpush.bf16.msra.mxu0 0
  %1017 = vmatpush.bf16.msra.mxu0 0
  %1018 = vmatpush.bf16.msra.mxu0 0
  %1019 = vmatpush.bf16.msra.mxu0 %v459
  %1020 = vmatmul.bf16.gmra.mxu0 %v1010
  %v1021 = vpop.f32.mrf.mxu0
  %v1022 = vadd.f32 0.0, %v1021
  %v1023 = vpop.f32.mrf.mxu0
  %1024 = vdwg.mxu0
  %v1026 = vsel %vm111, %v66, 0
  %1028 = vmatpush.bf16.msra.mxu0 0
  %1029 = vmatpush.bf16.msra.mxu0 0
  %1030 = vmatpush.bf16.msra.mxu0 0
  %1031 = vmatpush.bf16.msra.mxu0 0
  %1032 = vmatpush.bf16.msra.mxu0 0
  %1033 = vmatpush.bf16.msra.mxu0 0
  %1034 = vmatpush.bf16.msra.mxu0 0
  %1035 = vmatpush.bf16.msra.mxu0 %v478
  %1036 = vmatmul.bf16.gmra.mxu0 %v1026
  %v1037 = vpop.f32.mrf.mxu0
  %v1038 = vadd.f32 0.0, %v1037
  %v1039 = vpop.f32.mrf.mxu0
  %1040 = vdwg.mxu0
  %v1042 = vsel %vm111, %v67, 0
  %1044 = vmatpush.bf16.msra.mxu0 0
  %1045 = vmatpush.bf16.msra.mxu0 0
  %1046 = vmatpush.bf16.msra.mxu0 0
  %1047 = vmatpush.bf16.msra.mxu0 0
  %1048 = vmatpush.bf16.msra.mxu0 0
  %1049 = vmatpush.bf16.msra.mxu0 0
  %1050 = vmatpush.bf16.msra.mxu0 0
  %1051 = vmatpush.bf16.msra.mxu0 %v497
  %1052 = vmatmul.bf16.gmra.mxu0 %v1042
  %v1053 = vpop.f32.mrf.mxu0
  %v1054 = vadd.f32 0.0, %v1053
  %v1055 = vpop.f32.mrf.mxu0
  %1056 = vdwg.mxu0
  %v1058 = vsel %vm111, %v68, 0
  %1060 = vmatpush.bf16.msra.mxu0 0
  %1061 = vmatpush.bf16.msra.mxu0 0
  %1062 = vmatpush.bf16.msra.mxu0 0
  %1063 = vmatpush.bf16.msra.mxu0 0
  %1064 = vmatpush.bf16.msra.mxu0 0
  %1065 = vmatpush.bf16.msra.mxu0 0
  %1066 = vmatpush.bf16.msra.mxu0 0
  %1067 = vmatpush.bf16.msra.mxu0 %v516
  %1068 = vmatmul.bf16.gmra.mxu0 %v1058
  %v1069 = vpop.f32.mrf.mxu0
  %v1070 = vadd.f32 0.0, %v1069
  %v1071 = vpop.f32.mrf.mxu0
  %1072 = vdwg.mxu0
  %v1074 = vsel %vm111, %v69, 0
  %1076 = vmatpush.bf16.msra.mxu0 0
  %1077 = vmatpush.bf16.msra.mxu0 0
  %1078 = vmatpush.bf16.msra.mxu0 0
  %1079 = vmatpush.bf16.msra.mxu0 0
  %1080 = vmatpush.bf16.msra.mxu0 0
  %1081 = vmatpush.bf16.msra.mxu0 0
  %1082 = vmatpush.bf16.msra.mxu0 0
  %1083 = vmatpush.bf16.msra.mxu0 %v535
  %1084 = vmatmul.bf16.gmra.mxu0 %v1074
  %v1085 = vpop.f32.mrf.mxu0
  %v1086 = vadd.f32 0.0, %v1085
  %v1087 = vpop.f32.mrf.mxu0
  %1088 = vdwg.mxu0
  %v1090 = vsel %vm111, %v70, 0
  %1092 = vmatpush.bf16.msra.mxu0 0
  %1093 = vmatpush.bf16.msra.mxu0 0
  %1094 = vmatpush.bf16.msra.mxu0 0
  %1095 = vmatpush.bf16.msra.mxu0 0
  %1096 = vmatpush.bf16.msra.mxu0 0
  %1097 = vmatpush.bf16.msra.mxu0 0
  %1098 = vmatpush.bf16.msra.mxu0 0
  %1099 = vmatpush.bf16.msra.mxu0 %v554
  %1100 = vmatmul.bf16.gmra.mxu0 %v1090
  %v1101 = vpop.f32.mrf.mxu0
  %v1102 = vadd.f32 0.0, %v1101
  %v1103 = vpop.f32.mrf.mxu0
  %1104 = vdwg.mxu0
  %v1106 = vsel %vm111, %v71, 0
  %1108 = vmatpush.bf16.msra.mxu0 0
  %1109 = vmatpush.bf16.msra.mxu0 0
  %1110 = vmatpush.bf16.msra.mxu0 0
  %1111 = vmatpush.bf16.msra.mxu0 0
  %1112 = vmatpush.bf16.msra.mxu0 0
  %1113 = vmatpush.bf16.msra.mxu0 0
  %1114 = vmatpush.bf16.msra.mxu0 0
  %1115 = vmatpush.bf16.msra.mxu0 %v573
  %1116 = vmatmul.bf16.gmra.mxu0 %v1106
  %v1117 = vpop.f32.mrf.mxu0
  %v1118 = vadd.f32 0.0, %v1117
  %v1119 = vpop.f32.mrf.mxu0
  %1120 = vdwg.mxu0
  %v1122 = vsel %vm111, %v72, 0
  %1124 = vmatpush.bf16.msra.mxu0 0
  %1125 = vmatpush.bf16.msra.mxu0 0
  %1126 = vmatpush.bf16.msra.mxu0 0
  %1127 = vmatpush.bf16.msra.mxu0 0
  %1128 = vmatpush.bf16.msra.mxu0 0
  %1129 = vmatpush.bf16.msra.mxu0 0
  %1130 = vmatpush.bf16.msra.mxu0 0
  %1131 = vmatpush.bf16.msra.mxu0 %v592
  %1132 = vmatmul.bf16.gmra.mxu0 %v1122
  %v1133 = vpop.f32.mrf.mxu0
  %v1134 = vadd.f32 0.0, %v1133
  %v1135 = vpop.f32.mrf.mxu0
  %1136 = vdwg.mxu0
  %v1138 = vsel %vm111, %v73, 0
  %1140 = vmatpush.bf16.msra.mxu0 0
  %1141 = vmatpush.bf16.msra.mxu0 0
  %1142 = vmatpush.bf16.msra.mxu0 0
  %1143 = vmatpush.bf16.msra.mxu0 0
  %1144 = vmatpush.bf16.msra.mxu0 0
  %1145 = vmatpush.bf16.msra.mxu0 0
  %1146 = vmatpush.bf16.msra.mxu0 0
  %1147 = vmatpush.bf16.msra.mxu0 %v611
  %1148 = vmatmul.bf16.gmra.mxu0 %v1138
  %v1149 = vpop.f32.mrf.mxu0
  %v1150 = vadd.f32 0.0, %v1149
  %v1151 = vpop.f32.mrf.mxu0
  %1152 = vdwg.mxu0
  %v1154 = vsel %vm111, %v74, 0
  %1156 = vmatpush.bf16.msra.mxu0 0
  %1157 = vmatpush.bf16.msra.mxu0 0
  %1158 = vmatpush.bf16.msra.mxu0 0
  %1159 = vmatpush.bf16.msra.mxu0 0
  %1160 = vmatpush.bf16.msra.mxu0 0
  %1161 = vmatpush.bf16.msra.mxu0 0
  %1162 = vmatpush.bf16.msra.mxu0 0
  %1163 = vmatpush.bf16.msra.mxu0 %v630
  %1164 = vmatmul.bf16.gmra.mxu0 %v1154
  %v1165 = vpop.f32.mrf.mxu0
  %v1166 = vadd.f32 0.0, %v1165
  %v1167 = vpop.f32.mrf.mxu0
  %1168 = vdwg.mxu0
  %v1170 = vsel %vm111, %v75, 0
  %1172 = vmatpush.bf16.msra.mxu0 0
  %1173 = vmatpush.bf16.msra.mxu0 0
  %1174 = vmatpush.bf16.msra.mxu0 0
  %1175 = vmatpush.bf16.msra.mxu0 0
  %1176 = vmatpush.bf16.msra.mxu0 0
  %1177 = vmatpush.bf16.msra.mxu0 0
  %1178 = vmatpush.bf16.msra.mxu0 0
  %1179 = vmatpush.bf16.msra.mxu0 %v649
  %1180 = vmatmul.bf16.gmra.mxu0 %v1170
  %v1181 = vpop.f32.mrf.mxu0
  %v1182 = vadd.f32 0.0, %v1181
  %v1183 = vpop.f32.mrf.mxu0
  %1184 = vdwg.mxu0
  %v1186 = vsel %vm111, %v76, 0
  %1188 = vmatpush.bf16.msra.mxu0 0
  %1189 = vmatpush.bf16.msra.mxu0 0
  %1190 = vmatpush.bf16.msra.mxu0 0
  %1191 = vmatpush.bf16.msra.mxu0 0
  %1192 = vmatpush.bf16.msra.mxu0 0
  %1193 = vmatpush.bf16.msra.mxu0 0
  %1194 = vmatpush.bf16.msra.mxu0 0
  %1195 = vmatpush.bf16.msra.mxu0 %v668
  %1196 = vmatmul.bf16.gmra.mxu0 %v1186
  %v1197 = vpop.f32.mrf.mxu0
  %v1198 = vadd.f32 0.0, %v1197
  %v1199 = vpop.f32.mrf.mxu0
  %1200 = vdwg.mxu0
  %v1202 = vsel %vm111, %v77, 0
  %1204 = vmatpush.bf16.msra.mxu0 0
  %1205 = vmatpush.bf16.msra.mxu0 0
  %1206 = vmatpush.bf16.msra.mxu0 0
  %1207 = vmatpush.bf16.msra.mxu0 0
  %1208 = vmatpush.bf16.msra.mxu0 0
  %1209 = vmatpush.bf16.msra.mxu0 0
  %1210 = vmatpush.bf16.msra.mxu0 0
  %1211 = vmatpush.bf16.msra.mxu0 %v687
  %1212 = vmatmul.bf16.gmra.mxu0 %v1202
  %v1213 = vpop.f32.mrf.mxu0
  %v1214 = vadd.f32 0.0, %v1213
  %v1215 = vpop.f32.mrf.mxu0
  %1216 = vdwg.mxu0
  %v1218 = vsel %vm111, %v78, 0
  %1220 = vmatpush.bf16.msra.mxu0 0
  %1221 = vmatpush.bf16.msra.mxu0 0
  %1222 = vmatpush.bf16.msra.mxu0 0
  %1223 = vmatpush.bf16.msra.mxu0 0
  %1224 = vmatpush.bf16.msra.mxu0 0
  %1225 = vmatpush.bf16.msra.mxu0 0
  %1226 = vmatpush.bf16.msra.mxu0 0
  %1227 = vmatpush.bf16.msra.mxu0 %v706
  %1228 = vmatmul.bf16.gmra.mxu0 %v1218
  %v1229 = vpop.f32.mrf.mxu0
  %v1230 = vadd.f32 0.0, %v1229
  %v1231 = vpop.f32.mrf.mxu0
  %1232 = vdwg.mxu0
  %1265 = vrot.lane.b32.xlu0 %v734, 64
  %v1266 = vpop.permute.xlu0 %1265
  %1267 = vrot.lane.b32.xlu0 %v750, 64
  %v1268 = vpop.permute.xlu0 %1267
  %1269 = vrot.lane.b32.xlu0 %v766, 64
  %v1270 = vpop.permute.xlu0 %1269
  %1271 = vrot.lane.b32.xlu0 %v782, 64
  %v1272 = vpop.permute.xlu0 %1271
  %1273 = vrot.lane.b32.xlu0 %v798, 64
  %v1274 = vpop.permute.xlu0 %1273
  %1275 = vrot.lane.b32.xlu0 %v814, 64
  %v1276 = vpop.permute.xlu0 %1275
  %1277 = vrot.lane.b32.xlu0 %v830, 64
  %v1278 = vpop.permute.xlu0 %1277
  %1279 = vrot.lane.b32.xlu0 %v846, 64
  %v1280 = vpop.permute.xlu0 %1279
  %1281 = vrot.lane.b32.xlu0 %v862, 64
  %v1282 = vpop.permute.xlu0 %1281
  %1283 = vrot.lane.b32.xlu0 %v878, 64
  %v1284 = vpop.permute.xlu0 %1283
  %1285 = vrot.lane.b32.xlu0 %v894, 64
  %v1286 = vpop.permute.xlu0 %1285
  %1287 = vrot.lane.b32.xlu0 %v910, 64
  %v1288 = vpop.permute.xlu0 %1287
  %1289 = vrot.lane.b32.xlu0 %v926, 64
  %v1290 = vpop.permute.xlu0 %1289
  %1291 = vrot.lane.b32.xlu0 %v942, 64
  %v1292 = vpop.permute.xlu0 %1291
  %1293 = vrot.lane.b32.xlu0 %v958, 64
  %v1294 = vpop.permute.xlu0 %1293
  %1295 = vrot.lane.b32.xlu0 %v974, 64
  %v1296 = vpop.permute.xlu0 %1295
  %1297 = vrot.lane.b32.xlu0 %v990, 64
  %v1298 = vpop.permute.xlu0 %1297
  %1299 = vrot.lane.b32.xlu0 %v1006, 64
  %v1300 = vpop.permute.xlu0 %1299
  %1301 = vrot.lane.b32.xlu0 %v1022, 64
  %v1302 = vpop.permute.xlu0 %1301
  %1303 = vrot.lane.b32.xlu0 %v1038, 64
  %v1304 = vpop.permute.xlu0 %1303
  %1305 = vrot.lane.b32.xlu0 %v1054, 64
  %v1306 = vpop.permute.xlu0 %1305
  %1307 = vrot.lane.b32.xlu0 %v1070, 64
  %v1308 = vpop.permute.xlu0 %1307
  %1309 = vrot.lane.b32.xlu0 %v1086, 64
  %v1310 = vpop.permute.xlu0 %1309
  %1311 = vrot.lane.b32.xlu0 %v1102, 64
  %v1312 = vpop.permute.xlu0 %1311
  %1313 = vrot.lane.b32.xlu0 %v1118, 64
  %v1314 = vpop.permute.xlu0 %1313
  %1315 = vrot.lane.b32.xlu0 %v1134, 64
  %v1316 = vpop.permute.xlu0 %1315
  %1317 = vrot.lane.b32.xlu0 %v1150, 64
  %v1318 = vpop.permute.xlu0 %1317
  %1319 = vrot.lane.b32.xlu0 %v1166, 64
  %v1320 = vpop.permute.xlu0 %1319
  %1321 = vrot.lane.b32.xlu0 %v1182, 64
  %v1322 = vpop.permute.xlu0 %1321
  %1323 = vrot.lane.b32.xlu0 %v1198, 64
  %v1324 = vpop.permute.xlu0 %1323
  %1325 = vrot.lane.b32.xlu0 %v1214, 64
  %v1326 = vpop.permute.xlu0 %1325
  %1327 = vrot.lane.b32.xlu0 %v1230, 64
  %v1328 = vpop.permute.xlu0 %1327
  %v1361 = vsub.f32 %v129, %v1266
  %v1362 = vsub.f32 %v148, %v1268
  %v1363 = vsub.f32 %v167, %v1270
  %v1364 = vsub.f32 %v186, %v1272
  %v1365 = vsub.f32 %v205, %v1274
  %v1366 = vsub.f32 %v224, %v1276
  %v1367 = vsub.f32 %v243, %v1278
  %v1368 = vsub.f32 %v262, %v1280
  %v1369 = vsub.f32 %v281, %v1282
  %v1370 = vsub.f32 %v300, %v1284
  %v1371 = vsub.f32 %v319, %v1286
  %v1372 = vsub.f32 %v338, %v1288
  %v1373 = vsub.f32 %v357, %v1290
  %v1374 = vsub.f32 %v376, %v1292
  %v1375 = vsub.f32 %v395, %v1294
  %v1376 = vsub.f32 %v414, %v1296
  %v1377 = vsub.f32 %v433, %v1298
  %v1378 = vsub.f32 %v452, %v1300
  %v1379 = vsub.f32 %v471, %v1302
  %v1380 = vsub.f32 %v490, %v1304
  %v1381 = vsub.f32 %v509, %v1306
  %v1382 = vsub.f32 %v528, %v1308
  %v1383 = vsub.f32 %v547, %v1310
  %v1384 = vsub.f32 %v566, %v1312
  %v1385 = vsub.f32 %v585, %v1314
  %v1386 = vsub.f32 %v604, %v1316
  %v1387 = vsub.f32 %v623, %v1318
  %v1388 = vsub.f32 %v642, %v1320
  %v1389 = vsub.f32 %v661, %v1322
  %v1390 = vsub.f32 %v680, %v1324
  %v1391 = vsub.f32 %v699, %v1326
  %v1392 = vsub.f32 %v718, %v1328
  %vm1393 = vcmask 517120
  %1394 = vst.msk [vmem:[%s3] sm:$0x3] %vm1393, %v1361
  %1395 = vst.msk [vmem:[%s3 + $0x2] sm:$0x3] %vm1393, %v1362
  %1396 = vst.msk [vmem:[%s3 + $0x4] sm:$0x3] %vm1393, %v1363
  %1397 = vst.msk [vmem:[%s3 + $0x6] sm:$0x3] %vm1393, %v1364
  %1398 = vst.msk [vmem:[%s3 + $0x8] sm:$0x3] %vm1393, %v1365
  %1399 = vst.msk [vmem:[%s3 + $0xa] sm:$0x3] %vm1393, %v1366
  %1400 = vst.msk [vmem:[%s3 + $0xc] sm:$0x3] %vm1393, %v1367
  %1401 = vst.msk [vmem:[%s3 + $0xe] sm:$0x3] %vm1393, %v1368
  %1402 = vst.msk [vmem:[%s3 + $0x10] sm:$0x3] %vm1393, %v1369
  %1403 = vst.msk [vmem:[%s3 + $0x12] sm:$0x3] %vm1393, %v1370
  %1404 = vst.msk [vmem:[%s3 + $0x14] sm:$0x3] %vm1393, %v1371
  %1405 = vst.msk [vmem:[%s3 + $0x16] sm:$0x3] %vm1393, %v1372
  %1406 = vst.msk [vmem:[%s3 + $0x18] sm:$0x3] %vm1393, %v1373
  %1407 = vst.msk [vmem:[%s3 + $0x1a] sm:$0x3] %vm1393, %v1374
  %1408 = vst.msk [vmem:[%s3 + $0x1c] sm:$0x3] %vm1393, %v1375
  %1409 = vst.msk [vmem:[%s3 + $0x1e] sm:$0x3] %vm1393, %v1376
  %1410 = vst.msk [vmem:[%s3 + $0x20] sm:$0x3] %vm1393, %v1377
  %1411 = vst.msk [vmem:[%s3 + $0x22] sm:$0x3] %vm1393, %v1378
  %1412 = vst.msk [vmem:[%s3 + $0x24] sm:$0x3] %vm1393, %v1379
  %1413 = vst.msk [vmem:[%s3 + $0x26] sm:$0x3] %vm1393, %v1380
  %1414 = vst.msk [vmem:[%s3 + $0x28] sm:$0x3] %vm1393, %v1381
  %1415 = vst.msk [vmem:[%s3 + $0x2a] sm:$0x3] %vm1393, %v1382
  %1416 = vst.msk [vmem:[%s3 + $0x2c] sm:$0x3] %vm1393, %v1383
  %1417 = vst.msk [vmem:[%s3 + $0x2e] sm:$0x3] %vm1393, %v1384
  %1418 = vst.msk [vmem:[%s3 + $0x30] sm:$0x3] %vm1393, %v1385
  %1419 = vst.msk [vmem:[%s3 + $0x32] sm:$0x3] %vm1393, %v1386
  %1420 = vst.msk [vmem:[%s3 + $0x34] sm:$0x3] %vm1393, %v1387
  %1421 = vst.msk [vmem:[%s3 + $0x36] sm:$0x3] %vm1393, %v1388
  %1422 = vst.msk [vmem:[%s3 + $0x38] sm:$0x3] %vm1393, %v1389
  %1423 = vst.msk [vmem:[%s3 + $0x3a] sm:$0x3] %vm1393, %v1390
  %1424 = vst.msk [vmem:[%s3 + $0x3c] sm:$0x3] %vm1393, %v1391
  %1425 = vst.msk [vmem:[%s3 + $0x3e] sm:$0x3] %vm1393, %v1392
  %v1426 = vadd.f32 %v129, %v1266
  %v1427 = vadd.f32 %v148, %v1268
  %v1428 = vadd.f32 %v167, %v1270
  %v1429 = vadd.f32 %v186, %v1272
  %v1430 = vadd.f32 %v205, %v1274
  %v1431 = vadd.f32 %v224, %v1276
  %v1432 = vadd.f32 %v243, %v1278
  %v1433 = vadd.f32 %v262, %v1280
  %v1434 = vadd.f32 %v281, %v1282
  %v1435 = vadd.f32 %v300, %v1284
  %v1436 = vadd.f32 %v319, %v1286
  %v1437 = vadd.f32 %v338, %v1288
  %v1438 = vadd.f32 %v357, %v1290
  %v1439 = vadd.f32 %v376, %v1292
  %v1440 = vadd.f32 %v395, %v1294
  %v1441 = vadd.f32 %v414, %v1296
  %v1442 = vadd.f32 %v433, %v1298
  %v1443 = vadd.f32 %v452, %v1300
  %v1444 = vadd.f32 %v471, %v1302
  %v1445 = vadd.f32 %v490, %v1304
  %v1446 = vadd.f32 %v509, %v1306
  %v1447 = vadd.f32 %v528, %v1308
  %v1448 = vadd.f32 %v547, %v1310
  %v1449 = vadd.f32 %v566, %v1312
  %v1450 = vadd.f32 %v585, %v1314
  %v1451 = vadd.f32 %v604, %v1316
  %v1452 = vadd.f32 %v623, %v1318
  %v1453 = vadd.f32 %v642, %v1320
  %v1454 = vadd.f32 %v661, %v1322
  %v1455 = vadd.f32 %v680, %v1324
  %v1456 = vadd.f32 %v699, %v1326
  %v1457 = vadd.f32 %v718, %v1328
  %vm1458 = vcmask 1041920
  %1459 = vst.msk [vmem:[%s3] sm:$0x3] %vm1458, %v1426
  %1460 = vst.msk [vmem:[%s3 + $0x2] sm:$0x3] %vm1458, %v1427
  %1461 = vst.msk [vmem:[%s3 + $0x4] sm:$0x3] %vm1458, %v1428
  %1462 = vst.msk [vmem:[%s3 + $0x6] sm:$0x3] %vm1458, %v1429
  %1463 = vst.msk [vmem:[%s3 + $0x8] sm:$0x3] %vm1458, %v1430
  %1464 = vst.msk [vmem:[%s3 + $0xa] sm:$0x3] %vm1458, %v1431
  %1465 = vst.msk [vmem:[%s3 + $0xc] sm:$0x3] %vm1458, %v1432
  %1466 = vst.msk [vmem:[%s3 + $0xe] sm:$0x3] %vm1458, %v1433
  %1467 = vst.msk [vmem:[%s3 + $0x10] sm:$0x3] %vm1458, %v1434
  %1468 = vst.msk [vmem:[%s3 + $0x12] sm:$0x3] %vm1458, %v1435
  %1469 = vst.msk [vmem:[%s3 + $0x14] sm:$0x3] %vm1458, %v1436
  %1470 = vst.msk [vmem:[%s3 + $0x16] sm:$0x3] %vm1458, %v1437
  %1471 = vst.msk [vmem:[%s3 + $0x18] sm:$0x3] %vm1458, %v1438
  %1472 = vst.msk [vmem:[%s3 + $0x1a] sm:$0x3] %vm1458, %v1439
  %1473 = vst.msk [vmem:[%s3 + $0x1c] sm:$0x3] %vm1458, %v1440
  %1474 = vst.msk [vmem:[%s3 + $0x1e] sm:$0x3] %vm1458, %v1441
  %1475 = vst.msk [vmem:[%s3 + $0x20] sm:$0x3] %vm1458, %v1442
  %1476 = vst.msk [vmem:[%s3 + $0x22] sm:$0x3] %vm1458, %v1443
  %1477 = vst.msk [vmem:[%s3 + $0x24] sm:$0x3] %vm1458, %v1444
  %1478 = vst.msk [vmem:[%s3 + $0x26] sm:$0x3] %vm1458, %v1445
  %1479 = vst.msk [vmem:[%s3 + $0x28] sm:$0x3] %vm1458, %v1446
  %1480 = vst.msk [vmem:[%s3 + $0x2a] sm:$0x3] %vm1458, %v1447
  %1481 = vst.msk [vmem:[%s3 + $0x2c] sm:$0x3] %vm1458, %v1448
  %1482 = vst.msk [vmem:[%s3 + $0x2e] sm:$0x3] %vm1458, %v1449
  %1483 = vst.msk [vmem:[%s3 + $0x30] sm:$0x3] %vm1458, %v1450
  %1484 = vst.msk [vmem:[%s3 + $0x32] sm:$0x3] %vm1458, %v1451
  %1485 = vst.msk [vmem:[%s3 + $0x34] sm:$0x3] %vm1458, %v1452
  %1486 = vst.msk [vmem:[%s3 + $0x36] sm:$0x3] %vm1458, %v1453
  %1487 = vst.msk [vmem:[%s3 + $0x38] sm:$0x3] %vm1458, %v1454
  %1488 = vst.msk [vmem:[%s3 + $0x3a] sm:$0x3] %vm1458, %v1455
  %1489 = vst.msk [vmem:[%s3 + $0x3c] sm:$0x3] %vm1458, %v1456
  %1490 = vst.msk [vmem:[%s3 + $0x3e] sm:$0x3] %vm1458, %v1457
  // Predicated region
  $region14: #{fno_layer_forward.2} parent=0 // pred_check
    _
  $region15: #{fno_layer_forward.2} parent=0 // pred_check_branch
    %1492 = sbr.rel (0) target = $region17
  $region16: #{fno_layer_forward.2} parent=0 // pred_region
    _
  $region17: #{fno_layer_forward.2} parent=0 // pred_fallthru
    _
  // Predicated region
  $region18: #{fno_layer_forward.2} parent=0 // pred_check
    _
  $region19: #{fno_layer_forward.2} parent=0 // pred_check_branch
    %1494 = sbr.rel (0) target = $region21
  $region20: #{fno_layer_forward.2} parent=0 // pred_region
    _
  $region21: #{fno_layer_forward.2} parent=0 // pred_fallthru
    _

// kernel: reverse.0
$region0: #{reverse.0}
  %s0 = inlined_call_operand.vmem [shape: f32[2,8,16,7], index: 0, kind: input, shape index: {}]
  %s1 = inlined_call_operand.vmem [shape: f32[2,8,16,7], index: 1, kind: output, shape index: {}]
  $region1: #{reverse.0} parent=0
    #allocation0 [shape = 'u8[131072]{0}', space=vmem, size = 0x20000, scoped, tag = 'operand span for operand 0']
    #allocation1 [shape = 'u8[65536]{0}', space=vmem, size = 0x10000, scoped, tag = 'operand span for operand 1']
    %s2 = scalar_lea.vmem [#allocation0], 8
    // Predicated region
    $region2: #{reverse.0} parent=1 // pred_check
      _
    $region3: #{reverse.0} parent=1 // pred_check_branch
      %4 = sbr.rel (0) target = $region5
    $region4: #{reverse.0} parent=1 // pred_region
      // Predicated region
      $region6: #{reverse.0} parent=4 // pred_check
        _
      $region7: #{reverse.0} parent=4 // pred_check_branch
        %6 = sbr.rel (0) target = $region9
      $region8: #{reverse.0} parent=4 // pred_region
        // Predicated region
        $region21: #{reverse.0} parent=8 // pred_check
          _
        $region22: #{reverse.0} parent=8 // pred_check_branch
          %52 = sbr.rel (0) target = $region24
        $region23: #{reverse.0} parent=8 // pred_region
          loop: start=0, step=1, limit=1
          $region25: #{reverse.0} parent=23 // loop_pre_header
            _
          $region26: #{reverse.0} parent=23 // loop_header
            %s54 = sphi 0, %s58
            %p55 = scmp.ge.s32.totalorder %s54, 1
            %s59 = sphi %s0, %s0
            %s60 = sphi %s2, %s2
          $region27: #{reverse.0} parent=23 // loop_header_branch
            %57 = sbr.rel (%p55) target = $region31
          $region28: #{reverse.0} parent=23 // loop_body
            %v61 = vld [vmem:[%s59] sm:$0xff]
            %62 = vst [vmem:[%s60] sm:$0xff] %v61
            %v63 = vld [vmem:[%s59 + $0x8] sm:$0xff]
            %64 = vst [vmem:[%s60 + $0x10] sm:$0xff] %v63
            %v65 = vld [vmem:[%s59 + $0x10] sm:$0xff]
            %66 = vst [vmem:[%s60 + $0x20] sm:$0xff] %v65
            %v67 = vld [vmem:[%s59 + $0x18] sm:$0xff]
            %68 = vst [vmem:[%s60 + $0x30] sm:$0xff] %v67
            %v69 = vld [vmem:[%s59 + $0x20] sm:$0xff]
            %70 = vst [vmem:[%s60 + $0x40] sm:$0xff] %v69
            %v71 = vld [vmem:[%s59 + $0x28] sm:$0xff]
            %72 = vst [vmem:[%s60 + $0x50] sm:$0xff] %v71
            %v73 = vld [vmem:[%s59 + $0x30] sm:$0xff]
            %74 = vst [vmem:[%s60 + $0x60] sm:$0xff] %v73
            %v75 = vld [vmem:[%s59 + $0x38] sm:$0xff]
            %76 = vst [vmem:[%s60 + $0x70] sm:$0xff] %v75
            %v77 = vld [vmem:[%s59 + $0x40] sm:$0xff]
            %78 = vst [vmem:[%s60 + $0x80] sm:$0xff] %v77
            %v79 = vld [vmem:[%s59 + $0x48] sm:$0xff]
            %80 = vst [vmem:[%s60 + $0x90] sm:$0xff] %v79
            %v81 = vld [vmem:[%s59 + $0x50] sm:$0xff]
            %82 = vst [vmem:[%s60 + $0xa0] sm:$0xff] %v81
            %v83 = vld [vmem:[%s59 + $0x58] sm:$0xff]
            %84 = vst [vmem:[%s60 + $0xb0] sm:$0xff] %v83
            %v85 = vld [vmem:[%s59 + $0x60] sm:$0xff]
            %86 = vst [vmem:[%s60 + $0xc0] sm:$0xff] %v85
            %v87 = vld [vmem:[%s59 + $0x68] sm:$0xff]
            %88 = vst [vmem:[%s60 + $0xd0] sm:$0xff] %v87
            %v89 = vld [vmem:[%s59 + $0x70] sm:$0xff]
            %90 = vst [vmem:[%s60 + $0xe0] sm:$0xff] %v89
            %v91 = vld [vmem:[%s59 + $0x78] sm:$0xff]
            %92 = vst [vmem:[%s60 + $0xf0] sm:$0xff] %v91
          $region29: #{reverse.0} parent=23 // loop_footer
            %s58 = sadd.s32 1, %s54
          $region30: #{reverse.0} parent=23 // loop_footer_branch
            %53 = sbr.rel target = $region26
          $region31: #{reverse.0} parent=23 // loop_exit
            _
        $region24: #{reverse.0} parent=8 // pred_fallthru
          _
        // Predicated region
        $region32: #{reverse.0} parent=8 // pred_check
          _
        $region33: #{reverse.0} parent=8 // pred_check_branch
          %94 = sbr.rel target = $region35
        $region34: #{reverse.0} parent=8 // pred_region
          _
        $region35: #{reverse.0} parent=8 // pred_fallthru
          _
      $region9: #{reverse.0} parent=4 // pred_fallthru
        _
      // Predicated region
      $region10: #{reverse.0} parent=4 // pred_check
        _
      $region11: #{reverse.0} parent=4 // pred_check_branch
        %8 = sbr.rel target = $region13
      $region12: #{reverse.0} parent=4 // pred_region
        %s10 = ssub.s32 256, 1
        loop: start=0, step=1, limit=1
        $region14: #{reverse.0} parent=12 // loop_pre_header
          _
        $region15: #{reverse.0} parent=12 // loop_header
          %s12 = sphi 0, %s16
          %p13 = scmp.ge.s32.totalorder %s12, 1
          %s17 = sphi %s0, %s0
          %s18 = sphi %s2, %s2
        $region16: #{reverse.0} parent=12 // loop_header_branch
          %15 = sbr.rel (%p13) target = $region20
        $region17: #{reverse.0} parent=12 // loop_body
          %v19 = vld [vmem:[%s17] sm:%s10]
          %20 = vst [vmem:[%s18] sm:%s10] %v19
          %v21 = vld [vmem:[%s17 + $0x8] sm:%s10]
          %22 = vst [vmem:[%s18 + $0x10] sm:%s10] %v21
          %v23 = vld [vmem:[%s17 + $0x10] sm:%s10]
          %24 = vst [vmem:[%s18 + $0x20] sm:%s10] %v23
          %v25 = vld [vmem:[%s17 + $0x18] sm:%s10]
          %26 = vst [vmem:[%s18 + $0x30] sm:%s10] %v25
          %v27 = vld [vmem:[%s17 + $0x20] sm:%s10]
          %28 = vst [vmem:[%s18 + $0x40] sm:%s10] %v27
          %v29 = vld [vmem:[%s17 + $0x28] sm:%s10]
          %30 = vst [vmem:[%s18 + $0x50] sm:%s10] %v29
          %v31 = vld [vmem:[%s17 + $0x30] sm:%s10]
          %32 = vst [vmem:[%s18 + $0x60] sm:%s10] %v31
          %v33 = vld [vmem:[%s17 + $0x38] sm:%s10]
          %34 = vst [vmem:[%s18 + $0x70] sm:%s10] %v33
          %v35 = vld [vmem:[%s17 + $0x40] sm:%s10]
          %36 = vst [vmem:[%s18 + $0x80] sm:%s10] %v35
          %v37 = vld [vmem:[%s17 + $0x48] sm:%s10]
          %38 = vst [vmem:[%s18 + $0x90] sm:%s10] %v37
          %v39 = vld [vmem:[%s17 + $0x50] sm:%s10]
          %40 = vst [vmem:[%s18 + $0xa0] sm:%s10] %v39
          %v41 = vld [vmem:[%s17 + $0x58] sm:%s10]
          %42 = vst [vmem:[%s18 + $0xb0] sm:%s10] %v41
          %v43 = vld [vmem:[%s17 + $0x60] sm:%s10]
          %44 = vst [vmem:[%s18 + $0xc0] sm:%s10] %v43
          %v45 = vld [vmem:[%s17 + $0x68] sm:%s10]
          %46 = vst [vmem:[%s18 + $0xd0] sm:%s10] %v45
          %v47 = vld [vmem:[%s17 + $0x70] sm:%s10]
          %48 = vst [vmem:[%s18 + $0xe0] sm:%s10] %v47
          %v49 = vld [vmem:[%s17 + $0x78] sm:%s10]
          %50 = vst [vmem:[%s18 + $0xf0] sm:%s10] %v49
        $region18: #{reverse.0} parent=12 // loop_footer
          %s16 = sadd.s32 1, %s12
        $region19: #{reverse.0} parent=12 // loop_footer_branch
          %11 = sbr.rel target = $region15
        $region20: #{reverse.0} parent=12 // loop_exit
          _
      $region13: #{reverse.0} parent=4 // pred_fallthru
        _
    $region5: #{reverse.0} parent=1 // pred_fallthru
      _
    %95 = vnop
    %s96 = scalar_lea.vmem [#allocation0], 7
    %v97 = vld [vmem:[%s96] ss:$-1 sm:$0xff]
    %v98 = vrot.slane %v97, 1
    %99 = vst [vmem:[#allocation1] sm:$0xff] %v98
    %s100 = scalar_lea.vmem [#allocation0], 8
    %s101 = scalar_lea.vmem %s100, 7 [#allocation0]
    %v102 = vld [vmem:[%s101] ss:$-1 sm:$0xff]
    %v103 = vrot.slane %v102, 1
    %v104 = vlaneseq
    %v105 = vshrl.u32 %v104, 7
    %vm106 = vcmp.lt.s32.totalorder %v105, 7
    %107 = vst.msk [vmem:[#allocation1] sm:$0xff] %vm106, %v103
    %s108 = scalar_lea.vmem [#allocation1], 8
    %s109 = scalar_lea.vmem [#allocation0], 16
    %s110 = scalar_lea.vmem %s109, 7 [#allocation0]
    %v111 = vld [vmem:[%s110] ss:$-1 sm:$0xff]
    %v112 = vrot.slane %v111, 1
    %113 = vst [vmem:[%s108] sm:$0xff] %v112
    %s114 = scalar_lea.vmem %s109, 8 [#allocation0]
    %s115 = scalar_lea.vmem %s114, 7 [#allocation0]
    %v116 = vld [vmem:[%s115] ss:$-1 sm:$0xff]
    %v117 = vrot.slane %v116, 1
    %v118 = vlaneseq
    %v119 = vshrl.u32 %v118, 7
    %vm120 = vcmp.lt.s32.totalorder %v119, 7
    %121 = vst.msk [vmem:[%s108] sm:$0xff] %vm120, %v117
    %s122 = scalar_lea.vmem [#allocation1], 16
    %s123 = scalar_lea.vmem [#allocation0], 32
    %s124 = scalar_lea.vmem %s123, 7 [#allocation0]
    %v125 = vld [vmem:[%s124] ss:$-1 sm:$0xff]
    %v126 = vrot.slane %v125, 1
    %127 = vst [vmem:[%s122] sm:$0xff] %v126
    %s128 = scalar_lea.vmem %s123, 8 [#allocation0]
    %s129 = scalar_lea.vmem %s128, 7 [#allocation0]
    %v130 = vld [vmem:[%s129] ss:$-1 sm:$0xff]
    %v131 = vrot.slane %v130, 1
    %v132 = vlaneseq
    %v133 = vshrl.u32 %v132, 7
    %vm134 = vcmp.lt.s32.totalorder %v133, 7
    %135 = vst.msk [vmem:[%s122] sm:$0xff] %vm134, %v131
    %s136 = scalar_lea.vmem [#allocation1], 24
    %s137 = scalar_lea.vmem [#allocation0], 48
    %s138 = scalar_lea.vmem %s137, 7 [#allocation0]
    %v139 = vld [vmem:[%s138] ss:$-1 sm:$0xff]
    %v140 = vrot.slane %v139, 1
    %141 = vst [vmem:[%s136] sm:$0xff] %v140
    %s142 = scalar_lea.vmem %s137, 8 [#allocation0]
    %s143 = scalar_lea.vmem %s142, 7 [#allocation0]
    %v144 = vld [vmem:[%s143] ss:$-1 sm:$0xff]
    %v145 = vrot.slane %v144, 1
    %v146 = vlaneseq
    %v147 = vshrl.u32 %v146, 7
    %vm148 = vcmp.lt.s32.totalorder %v147, 7
    %149 = vst.msk [vmem:[%s136] sm:$0xff] %vm148, %v145
    %s150 = scalar_lea.vmem [#allocation1], 32
    %s151 = scalar_lea.vmem [#allocation0], 64
    %s152 = scalar_lea.vmem %s151, 7 [#allocation0]
    %v153 = vld [vmem:[%s152] ss:$-1 sm:$0xff]
    %v154 = vrot.slane %v153, 1
    %155 = vst [vmem:[%s150] sm:$0xff] %v154
    %s156 = scalar_lea.vmem %s151, 8 [#allocation0]
    %s157 = scalar_lea.vmem %s156, 7 [#allocation0]
    %v158 = vld [vmem:[%s157] ss:$-1 sm:$0xff]
    %v159 = vrot.slane %v158, 1
    %v160 = vlaneseq
    %v161 = vshrl.u32 %v160, 7
    %vm162 = vcmp.lt.s32.totalorder %v161, 7
    %163 = vst.msk [vmem:[%s150] sm:$0xff] %vm162, %v159
    %s164 = scalar_lea.vmem [#allocation1], 40
    %s165 = scalar_lea.vmem [#allocation0], 80
    %s166 = scalar_lea.vmem %s165, 7 [#allocation0]
    %v167 = vld [vmem:[%s166] ss:$-1 sm:$0xff]
    %v168 = vrot.slane %v167, 1
    %169 = vst [vmem:[%s164] sm:$0xff] %v168
    %s170 = scalar_lea.vmem %s165, 8 [#allocation0]
    %s171 = scalar_lea.vmem %s170, 7 [#allocation0]
    %v172 = vld [vmem:[%s171] ss:$-1 sm:$0xff]
    %v173 = vrot.slane %v172, 1
    %v174 = vlaneseq
    %v175 = vshrl.u32 %v174, 7
    %vm176 = vcmp.lt.s32.totalorder %v175, 7
    %177 = vst.msk [vmem:[%s164] sm:$0xff] %vm176, %v173
    %s178 = scalar_lea.vmem [#allocation1], 48
    %s179 = scalar_lea.vmem [#allocation0], 96
    %s180 = scalar_lea.vmem %s179, 7 [#allocation0]
    %v181 = vld [vmem:[%s180] ss:$-1 sm:$0xff]
    %v182 = vrot.slane %v181, 1
    %183 = vst [vmem:[%s178] sm:$0xff] %v182
    %s184 = scalar_lea.vmem %s179, 8 [#allocation0]
    %s185 = scalar_lea.vmem %s184, 7 [#allocation0]
    %v186 = vld [vmem:[%s185] ss:$-1 sm:$0xff]
    %v187 = vrot.slane %v186, 1
    %v188 = vlaneseq
    %v189 = vshrl.u32 %v188, 7
    %vm190 = vcmp.lt.s32.totalorder %v189, 7
    %191 = vst.msk [vmem:[%s178] sm:$0xff] %vm190, %v187
    %s192 = scalar_lea.vmem [#allocation1], 56
    %s193 = scalar_lea.vmem [#allocation0], 112
    %s194 = scalar_lea.vmem %s193, 7 [#allocation0]
    %v195 = vld [vmem:[%s194] ss:$-1 sm:$0xff]
    %v196 = vrot.slane %v195, 1
    %197 = vst [vmem:[%s192] sm:$0xff] %v196
    %s198 = scalar_lea.vmem %s193, 8 [#allocation0]
    %s199 = scalar_lea.vmem %s198, 7 [#allocation0]
    %v200 = vld [vmem:[%s199] ss:$-1 sm:$0xff]
    %v201 = vrot.slane %v200, 1
    %v202 = vlaneseq
    %v203 = vshrl.u32 %v202, 7
    %vm204 = vcmp.lt.s32.totalorder %v203, 7
    %205 = vst.msk [vmem:[%s192] sm:$0xff] %vm204, %v201
    %s206 = scalar_lea.vmem [#allocation1], 64
    %s207 = scalar_lea.vmem [#allocation0], 128
    %s208 = scalar_lea.vmem %s207, 7 [#allocation0]
    %v209 = vld [vmem:[%s208] ss:$-1 sm:$0xff]
    %v210 = vrot.slane %v209, 1
    %211 = vst [vmem:[%s206] sm:$0xff] %v210
    %s212 = scalar_lea.vmem %s207, 8 [#allocation0]
    %s213 = scalar_lea.vmem %s212, 7 [#allocation0]
    %v214 = vld [vmem:[%s213] ss:$-1 sm:$0xff]
    %v215 = vrot.slane %v214, 1
    %v216 = vlaneseq
    %v217 = vshrl.u32 %v216, 7
    %vm218 = vcmp.lt.s32.totalorder %v217, 7
    %219 = vst.msk [vmem:[%s206] sm:$0xff] %vm218, %v215
    %s220 = scalar_lea.vmem [#allocation1], 72
    %s221 = scalar_lea.vmem [#allocation0], 144
    %s222 = scalar_lea.vmem %s221, 7 [#allocation0]
    %v223 = vld [vmem:[%s222] ss:$-1 sm:$0xff]
    %v224 = vrot.slane %v223, 1
    %225 = vst [vmem:[%s220] sm:$0xff] %v224
    %s226 = scalar_lea.vmem %s221, 8 [#allocation0]
    %s227 = scalar_lea.vmem %s226, 7 [#allocation0]
    %v228 = vld [vmem:[%s227] ss:$-1 sm:$0xff]
    %v229 = vrot.slane %v228, 1
    %v230 = vlaneseq
    %v231 = vshrl.u32 %v230, 7
    %vm232 = vcmp.lt.s32.totalorder %v231, 7
    %233 = vst.msk [vmem:[%s220] sm:$0xff] %vm232, %v229
    %s234 = scalar_lea.vmem [#allocation1], 80
    %s235 = scalar_lea.vmem [#allocation0], 160
    %s236 = scalar_lea.vmem %s235, 7 [#allocation0]
    %v237 = vld [vmem:[%s236] ss:$-1 sm:$0xff]
    %v238 = vrot.slane %v237, 1
    %239 = vst [vmem:[%s234] sm:$0xff] %v238
    %s240 = scalar_lea.vmem %s235, 8 [#allocation0]
    %s241 = scalar_lea.vmem %s240, 7 [#allocation0]
    %v242 = vld [vmem:[%s241] ss:$-1 sm:$0xff]
    %v243 = vrot.slane %v242, 1
    %v244 = vlaneseq
    %v245 = vshrl.u32 %v244, 7
    %vm246 = vcmp.lt.s32.totalorder %v245, 7
    %247 = vst.msk [vmem:[%s234] sm:$0xff] %vm246, %v243
    %s248 = scalar_lea.vmem [#allocation1], 88
    %s249 = scalar_lea.vmem [#allocation0], 176
    %s250 = scalar_lea.vmem %s249, 7 [#allocation0]
    %v251 = vld [vmem:[%s250] ss:$-1 sm:$0xff]
    %v252 = vrot.slane %v251, 1
    %253 = vst [vmem:[%s248] sm:$0xff] %v252
    %s254 = scalar_lea.vmem %s249, 8 [#allocation0]
    %s255 = scalar_lea.vmem %s254, 7 [#allocation0]
    %v256 = vld [vmem:[%s255] ss:$-1 sm:$0xff]
    %v257 = vrot.slane %v256, 1
    %v258 = vlaneseq
    %v259 = vshrl.u32 %v258, 7
    %vm260 = vcmp.lt.s32.totalorder %v259, 7
    %261 = vst.msk [vmem:[%s248] sm:$0xff] %vm260, %v257
    %s262 = scalar_lea.vmem [#allocation1], 96
    %s263 = scalar_lea.vmem [#allocation0], 192
    %s264 = scalar_lea.vmem %s263, 7 [#allocation0]
    %v265 = vld [vmem:[%s264] ss:$-1 sm:$0xff]
    %v266 = vrot.slane %v265, 1
    %267 = vst [vmem:[%s262] sm:$0xff] %v266
    %s268 = scalar_lea.vmem %s263, 8 [#allocation0]
    %s269 = scalar_lea.vmem %s268, 7 [#allocation0]
    %v270 = vld [vmem:[%s269] ss:$-1 sm:$0xff]
    %v271 = vrot.slane %v270, 1
    %v272 = vlaneseq
    %v273 = vshrl.u32 %v272, 7
    %vm274 = vcmp.lt.s32.totalorder %v273, 7
    %275 = vst.msk [vmem:[%s262] sm:$0xff] %vm274, %v271
    %s276 = scalar_lea.vmem [#allocation1], 104
    %s277 = scalar_lea.vmem [#allocation0], 208
    %s278 = scalar_lea.vmem %s277, 7 [#allocation0]
    %v279 = vld [vmem:[%s278] ss:$-1 sm:$0xff]
    %v280 = vrot.slane %v279, 1
    %281 = vst [vmem:[%s276] sm:$0xff] %v280
    %s282 = scalar_lea.vmem %s277, 8 [#allocation0]
    %s283 = scalar_lea.vmem %s282, 7 [#allocation0]
    %v284 = vld [vmem:[%s283] ss:$-1 sm:$0xff]
    %v285 = vrot.slane %v284, 1
    %v286 = vlaneseq
    %v287 = vshrl.u32 %v286, 7
    %vm288 = vcmp.lt.s32.totalorder %v287, 7
    %289 = vst.msk [vmem:[%s276] sm:$0xff] %vm288, %v285
    %s290 = scalar_lea.vmem [#allocation1], 112
    %s291 = scalar_lea.vmem [#allocation0], 224
    %s292 = scalar_lea.vmem %s291, 7 [#allocation0]
    %v293 = vld [vmem:[%s292] ss:$-1 sm:$0xff]
    %v294 = vrot.slane %v293, 1
    %295 = vst [vmem:[%s290] sm:$0xff] %v294
    %s296 = scalar_lea.vmem %s291, 8 [#allocation0]
    %s297 = scalar_lea.vmem %s296, 7 [#allocation0]
    %v298 = vld [vmem:[%s297] ss:$-1 sm:$0xff]
    %v299 = vrot.slane %v298, 1
    %v300 = vlaneseq
    %v301 = vshrl.u32 %v300, 7
    %vm302 = vcmp.lt.s32.totalorder %v301, 7
    %303 = vst.msk [vmem:[%s290] sm:$0xff] %vm302, %v299
    %s304 = scalar_lea.vmem [#allocation1], 120
    %s305 = scalar_lea.vmem [#allocation0], 240
    %s306 = scalar_lea.vmem %s305, 7 [#allocation0]
    %v307 = vld [vmem:[%s306] ss:$-1 sm:$0xff]
    %v308 = vrot.slane %v307, 1
    %309 = vst [vmem:[%s304] sm:$0xff] %v308
    %s310 = scalar_lea.vmem %s305, 8 [#allocation0]
    %s311 = scalar_lea.vmem %s310, 7 [#allocation0]
    %v312 = vld [vmem:[%s311] ss:$-1 sm:$0xff]
    %v313 = vrot.slane %v312, 1
    %v314 = vlaneseq
    %v315 = vshrl.u32 %v314, 7
    %vm316 = vcmp.lt.s32.totalorder %v315, 7
    %317 = vst.msk [vmem:[%s304] sm:$0xff] %vm316, %v313
    // Predicated region
    $region36: #{reverse.0} parent=1 // pred_check
      _
    $region37: #{reverse.0} parent=1 // pred_check_branch
      %319 = sbr.rel (0) target = $region39
    $region38: #{reverse.0} parent=1 // pred_region
      // Predicated region
      $region40: #{reverse.0} parent=38 // pred_check
        _
      $region41: #{reverse.0} parent=38 // pred_check_branch
        %321 = sbr.rel (0) target = $region43
      $region42: #{reverse.0} parent=38 // pred_region
        // Predicated region
        $region55: #{reverse.0} parent=42 // pred_check
          _
        $region56: #{reverse.0} parent=42 // pred_check_branch
          %367 = sbr.rel (0) target = $region58
        $region57: #{reverse.0} parent=42 // pred_region
          loop: start=0, step=1, limit=1
          $region59: #{reverse.0} parent=57 // loop_pre_header
            _
          $region60: #{reverse.0} parent=57 // loop_header
            %s369 = sphi 0, %s373
            %p370 = scmp.ge.s32.totalorder %s369, 1
            %s374 = sphi [#allocation1], [#allocation1]
            %s375 = sphi %s1, %s1
          $region61: #{reverse.0} parent=57 // loop_header_branch
            %372 = sbr.rel (%p370) target = $region65
          $region62: #{reverse.0} parent=57 // loop_body
            %v376 = vld [vmem:[%s374] sm:$0xff]
            %377 = vst [vmem:[%s375] sm:$0xff] %v376
            %v378 = vld [vmem:[%s374 + $0x8] sm:$0xff]
            %379 = vst [vmem:[%s375 + $0x8] sm:$0xff] %v378
            %v380 = vld [vmem:[%s374 + $0x10] sm:$0xff]
            %381 = vst [vmem:[%s375 + $0x10] sm:$0xff] %v380
            %v382 = vld [vmem:[%s374 + $0x18] sm:$0xff]
            %383 = vst [vmem:[%s375 + $0x18] sm:$0xff] %v382
            %v384 = vld [vmem:[%s374 + $0x20] sm:$0xff]
            %385 = vst [vmem:[%s375 + $0x20] sm:$0xff] %v384
            %v386 = vld [vmem:[%s374 + $0x28] sm:$0xff]
            %387 = vst [vmem:[%s375 + $0x28] sm:$0xff] %v386
            %v388 = vld [vmem:[%s374 + $0x30] sm:$0xff]
            %389 = vst [vmem:[%s375 + $0x30] sm:$0xff] %v388
            %v390 = vld [vmem:[%s374 + $0x38] sm:$0xff]
            %391 = vst [vmem:[%s375 + $0x38] sm:$0xff] %v390
            %v392 = vld [vmem:[%s374 + $0x40] sm:$0xff]
            %393 = vst [vmem:[%s375 + $0x40] sm:$0xff] %v392
            %v394 = vld [vmem:[%s374 + $0x48] sm:$0xff]
            %395 = vst [vmem:[%s375 + $0x48] sm:$0xff] %v394
            %v396 = vld [vmem:[%s374 + $0x50] sm:$0xff]
            %397 = vst [vmem:[%s375 + $0x50] sm:$0xff] %v396
            %v398 = vld [vmem:[%s374 + $0x58] sm:$0xff]
            %399 = vst [vmem:[%s375 + $0x58] sm:$0xff] %v398
            %v400 = vld [vmem:[%s374 + $0x60] sm:$0xff]
            %401 = vst [vmem:[%s375 + $0x60] sm:$0xff] %v400
            %v402 = vld [vmem:[%s374 + $0x68] sm:$0xff]
            %403 = vst [vmem:[%s375 + $0x68] sm:$0xff] %v402
            %v404 = vld [vmem:[%s374 + $0x70] sm:$0xff]
            %405 = vst [vmem:[%s375 + $0x70] sm:$0xff] %v404
            %v406 = vld [vmem:[%s374 + $0x78] sm:$0xff]
            %407 = vst [vmem:[%s375 + $0x78] sm:$0xff] %v406
          $region63: #{reverse.0} parent=57 // loop_footer
            %s373 = sadd.s32 1, %s369
          $region64: #{reverse.0} parent=57 // loop_footer_branch
            %368 = sbr.rel target = $region60
          $region65: #{reverse.0} parent=57 // loop_exit
            _
        $region58: #{reverse.0} parent=42 // pred_fallthru
          _
        // Predicated region
        $region66: #{reverse.0} parent=42 // pred_check
          _
        $region67: #{reverse.0} parent=42 // pred_check_branch
          %409 = sbr.rel target = $region69
        $region68: #{reverse.0} parent=42 // pred_region
          _
        $region69: #{reverse.0} parent=42 // pred_fallthru
          _
      $region43: #{reverse.0} parent=38 // pred_fallthru
        _
      // Predicated region
      $region44: #{reverse.0} parent=38 // pred_check
        _
      $region45: #{reverse.0} parent=38 // pred_check_branch
        %323 = sbr.rel target = $region47
      $region46: #{reverse.0} parent=38 // pred_region
        %s325 = ssub.s32 256, 1
        loop: start=0, step=1, limit=1
        $region48: #{reverse.0} parent=46 // loop_pre_header
          _
        $region49: #{reverse.0} parent=46 // loop_header
          %s327 = sphi 0, %s331
          %p328 = scmp.ge.s32.totalorder %s327, 1
          %s332 = sphi [#allocation1], [#allocation1]
          %s333 = sphi %s1, %s1
        $region50: #{reverse.0} parent=46 // loop_header_branch
          %330 = sbr.rel (%p328) target = $region54
        $region51: #{reverse.0} parent=46 // loop_body
          %v334 = vld [vmem:[%s332] sm:%s325]
          %335 = vst [vmem:[%s333] sm:%s325] %v334
          %v336 = vld [vmem:[%s332 + $0x8] sm:%s325]
          %337 = vst [vmem:[%s333 + $0x8] sm:%s325] %v336
          %v338 = vld [vmem:[%s332 + $0x10] sm:%s325]
          %339 = vst [vmem:[%s333 + $0x10] sm:%s325] %v338
          %v340 = vld [vmem:[%s332 + $0x18] sm:%s325]
          %341 = vst [vmem:[%s333 + $0x18] sm:%s325] %v340
          %v342 = vld [vmem:[%s332 + $0x20] sm:%s325]
          %343 = vst [vmem:[%s333 + $0x20] sm:%s325] %v342
          %v344 = vld [vmem:[%s332 + $0x28] sm:%s325]
          %345 = vst [vmem:[%s333 + $0x28] sm:%s325] %v344
          %v346 = vld [vmem:[%s332 + $0x30] sm:%s325]
          %347 = vst [vmem:[%s333 + $0x30] sm:%s325] %v346
          %v348 = vld [vmem:[%s332 + $0x38] sm:%s325]
          %349 = vst [vmem:[%s333 + $0x38] sm:%s325] %v348
          %v350 = vld [vmem:[%s332 + $0x40] sm:%s325]
          %351 = vst [vmem:[%s333 + $0x40] sm:%s325] %v350
          %v352 = vld [vmem:[%s332 + $0x48] sm:%s325]
          %353 = vst [vmem:[%s333 + $0x48] sm:%s325] %v352
          %v354 = vld [vmem:[%s332 + $0x50] sm:%s325]
          %355 = vst [vmem:[%s333 + $0x50] sm:%s325] %v354
          %v356 = vld [vmem:[%s332 + $0x58] sm:%s325]
          %357 = vst [vmem:[%s333 + $0x58] sm:%s325] %v356
          %v358 = vld [vmem:[%s332 + $0x60] sm:%s325]
          %359 = vst [vmem:[%s333 + $0x60] sm:%s325] %v358
          %v360 = vld [vmem:[%s332 + $0x68] sm:%s325]
          %361 = vst [vmem:[%s333 + $0x68] sm:%s325] %v360
          %v362 = vld [vmem:[%s332 + $0x70] sm:%s325]
          %363 = vst [vmem:[%s333 + $0x70] sm:%s325] %v362
          %v364 = vld [vmem:[%s332 + $0x78] sm:%s325]
          %365 = vst [vmem:[%s333 + $0x78] sm:%s325] %v364
        $region52: #{reverse.0} parent=46 // loop_footer
          %s331 = sadd.s32 1, %s327
        $region53: #{reverse.0} parent=46 // loop_footer_branch
          %326 = sbr.rel target = $region49
        $region54: #{reverse.0} parent=46 // loop_exit
          _
      $region47: #{reverse.0} parent=38 // pred_fallthru
        _
    $region39: #{reverse.0} parent=1 // pred_fallthru
      _
    %410 = vnop

// kernel: fno_layer_forward.3
$region0: #{fno_layer_forward.3}
  #allocation0 [shape = 'u32[]', space=smem, size = 0x4, offset = 0x4, fixed_abs, tag = 'smem constant byte address 0x4 - core index']
  #allocation1 [shape = 'u32[72,128]{1,0:T(1,128)}', space=vmem, size = 0x9000, scoped, tag = 'internal scratch']
  %s0 = inlined_call_operand.vmem [shape: f32[2,8,256], index: 0, kind: input, shape index: {}]
  %s1 = inlined_call_operand.vmem [shape: f32[2,8,256], index: 1, kind: input, shape index: {}]
  %s2 = inlined_call_operand.vmem [shape: bf16[8,8], index: 2, kind: input, shape index: {}]
  %s3 = inlined_call_operand.vmem [shape: f32[8,1], index: 3, kind: input, shape index: {}]
  %s4 = inlined_call_operand.vmem [shape: f32[2,8,256], index: 4, kind: output, shape index: {}]
  %s5 = sld [smem:[#allocation0]]
  $region49: #{fno_layer_forward.3} parent=0
    _
  %s7 = ssub.s32 1, %s5
  %s8 = scalar_select 0, %s7, %s5
  loop: start=0, step=1, limit=4
  $region2: #{fno_layer_forward.3} parent=0 // loop_pre_header
    _
  $region3: #{fno_layer_forward.3} parent=0 // loop_header
    %s10 = sphi 0, %s14
    %p11 = scmp.ge.s32.totalorder %s10, 4
    %s17 = sphi 0, %s29
    %s18 = sphi 0, %s25
    %s19 = sphi 0, %s17
    %s20 = sphi 0, %s18
    %s21 = sphi 0, %s19
    %s22 = sphi 0, %s20
    %s34 = sphi 0, %s36
    %s37 = sphi 0, %s34
    %s38 = sphi 0, %s37
    %s54 = sphi 0, %s38
    %s62 = sphi 0, %s64
    %s65 = sphi 0, %s62
    %s66 = sphi 0, %s65
    %s82 = sphi 0, %s66
    %s86 = sphi 0, %s86
    %s88 = sphi 0, %s86
    %s89 = sphi 0, %s88
    %s103 = sphi 0, %s89
    %s107 = sphi 0, %s107
    %s109 = sphi 0, %s107
    %s110 = sphi 0, %s109
    %s124 = sphi 0, %s110
    %s132 = sphi 0, %s134
    %s135 = sphi 0, %s132
    %s136 = sphi 0, %s135
    %s152 = sphi 0, %s136
  $region4: #{fno_layer_forward.3} parent=0 // loop_header_branch
    %13 = sbr.rel (%p11) target = $region8
  $region5: #{fno_layer_forward.3} parent=0 // loop_body
    %s15 = ssub.s32 %s10, 1
    %s16 = ssub.s32 %s10, 2
    %s23 = sadd.s32 1, %s18
    %p24 = scmp.ge.s32.totalorder %s23, 1
    %s25 = scalar_select %p24, 0, %s23
    %s26 = sadd.s32 1, %s17
    %s27 = scalar_select %p24, %s26, %s17
    %p28 = scmp.ge.s32.totalorder %s27, 2
    %s29 = scalar_select %p28, 0, %s27
    %s30 = ssub.s32 %s17, %s29
    %s31 = ssub.s32 %s18, %s25
    %s32 = sor.u32 %s30, %s31
    %p33 = scmp.eq.s32.totalorder %s32, 0
    %s35 = sadd.s32 %s34, 1
    %s36 = scalar_select %p33, %s34, %s35
    %p39 = pneg %p33
    %p40 = scmp.eq.s32.totalorder %s10, 1
    %p41 = por %p39, %p40
    %p42 = scmp.ne.s32.totalorder %s34, %s37
    %p43 = scmp.eq.s32.totalorder %s10, 0
    %p44 = por %p42, %p43
    %p45 = scmp.ne.s32.totalorder %s34, %s37
    %p46 = scmp.eq.s32.totalorder %s15, 1
    %p47 = por %p45, %p46
    %p48 = scmp.ne.s32.totalorder %s37, %s38
    %p49 = scmp.eq.s32.totalorder %s15, 0
    %p50 = por %p48, %p49
    %p51 = scmp.ne.s32.totalorder %s37, %s38
    %p52 = scmp.eq.s32.totalorder %s16, 1
    %p53 = por %p51, %p52
    %p55 = scmp.ne.s32.totalorder %s38, %s54
    %p56 = scmp.eq.s32.totalorder %s16, 0
    %p57 = por %p55, %p56
    %s58 = ssub.s32 %s17, %s29
    %s59 = ssub.s32 %s18, %s25
    %s60 = sor.u32 %s58, %s59
    %p61 = scmp.eq.s32.totalorder %s60, 0
    %s63 = sadd.s32 %s62, 1
    %s64 = scalar_select %p61, %s62, %s63
    %p67 = pneg %p61
    %p68 = scmp.eq.s32.totalorder %s10, 1
    %p69 = por %p67, %p68
    %p70 = scmp.ne.s32.totalorder %s62, %s65
    %p71 = scmp.eq.s32.totalorder %s10, 0
    %p72 = por %p70, %p71
    %p73 = scmp.ne.s32.totalorder %s62, %s65
    %p74 = scmp.eq.s32.totalorder %s15, 1
    %p75 = por %p73, %p74
    %p76 = scmp.ne.s32.totalorder %s65, %s66
    %p77 = scmp.eq.s32.totalorder %s15, 0
    %p78 = por %p76, %p77
    %p79 = scmp.ne.s32.totalorder %s65, %s66
    %p80 = scmp.eq.s32.totalorder %s16, 1
    %p81 = por %p79, %p80
    %p83 = scmp.ne.s32.totalorder %s66, %s82
    %p84 = scmp.eq.s32.totalorder %s16, 0
    %p85 = por %p83, %p84
    %s87 = sadd.s32 %s86, 1
    %p90 = scmp.eq.s32.totalorder %s10, 1
    %p91 = scmp.ne.s32.totalorder %s86, %s88
    %p92 = scmp.eq.s32.totalorder %s10, 0
    %p93 = por %p91, %p92
    %p94 = scmp.ne.s32.totalorder %s86, %s88
    %p95 = scmp.eq.s32.totalorder %s15, 1
    %p96 = por %p94, %p95
    %p97 = scmp.ne.s32.totalorder %s88, %s89
    %p98 = scmp.eq.s32.totalorder %s15, 0
    %p99 = por %p97, %p98
    %p100 = scmp.ne.s32.totalorder %s88, %s89
    %p101 = scmp.eq.s32.totalorder %s16, 1
    %p102 = por %p100, %p101
    %p104 = scmp.ne.s32.totalorder %s89, %s103
    %p105 = scmp.eq.s32.totalorder %s16, 0
    %p106 = por %p104, %p105
    %s108 = sadd.s32 %s107, 1
    %p111 = scmp.eq.s32.totalorder %s10, 1
    %p112 = scmp.ne.s32.totalorder %s107, %s109
    %p113 = scmp.eq.s32.totalorder %s10, 0
    %p114 = por %p112, %p113
    %p115 = scmp.ne.s32.totalorder %s107, %s109
    %p116 = scmp.eq.s32.totalorder %s15, 1
    %p117 = por %p115, %p116
    %p118 = scmp.ne.s32.totalorder %s109, %s110
    %p119 = scmp.eq.s32.totalorder %s15, 0
    %p120 = por %p118, %p119
    %p121 = scmp.ne.s32.totalorder %s109, %s110
    %p122 = scmp.eq.s32.totalorder %s16, 1
    %p123 = por %p121, %p122
    %p125 = scmp.ne.s32.totalorder %s110, %s124
    %p126 = scmp.eq.s32.totalorder %s16, 0
    %p127 = por %p125, %p126
    %s128 = ssub.s32 %s17, %s29
    %s129 = ssub.s32 %s18, %s25
    %s130 = sor.u32 %s128, %s129
    %p131 = scmp.eq.s32.totalorder %s130, 0
    %s133 = sadd.s32 %s132, 1
    %s134 = scalar_select %p131, %s132, %s133
    %p137 = pneg %p131
    %p138 = scmp.eq.s32.totalorder %s10, 1
    %p139 = por %p137, %p138
    %p140 = scmp.ne.s32.totalorder %s132, %s135
    %p141 = scmp.eq.s32.totalorder %s10, 0
    %p142 = por %p140, %p141
    %p143 = scmp.ne.s32.totalorder %s132, %s135
    %p144 = scmp.eq.s32.totalorder %s15, 1
    %p145 = por %p143, %p144
    %p146 = scmp.ne.s32.totalorder %s135, %s136
    %p147 = scmp.eq.s32.totalorder %s15, 0
    %p148 = por %p146, %p147
    %p149 = scmp.ne.s32.totalorder %s135, %s136
    %p150 = scmp.eq.s32.totalorder %s16, 1
    %p151 = por %p149, %p150
    %p153 = scmp.ne.s32.totalorder %s136, %s152
    %p154 = scmp.eq.s32.totalorder %s16, 0
    %p155 = por %p153, %p154
    %p156 = scmp.le.s32.totalorder 1, %s10
    %p157 = scmp.lt.s32.totalorder %s10, 3
    %p158 = pnand %p156, %p157
    %p159 = pneg %p158
    // Predicated region
    $region9: #{fno_layer_forward.3} parent=5 // pred_check
      _
    $region10: #{fno_layer_forward.3} parent=5 // pred_check_branch
      %161 = sbr.rel (%p158) target = $region12
    $region11: #{fno_layer_forward.3} parent=5 // pred_region
      %s162 = ssub.s32 %s10, 1
      // Predicated region
      $region13: #{fno_layer_forward.3} parent=11 // pred_check
        %p163 = pneg %p99
      $region14: #{fno_layer_forward.3} parent=11 // pred_check_branch
        %165 = sbr.rel (%p163) target = $region16
      $region15: #{fno_layer_forward.3} parent=11 // pred_region
        _
      $region16: #{fno_layer_forward.3} parent=11 // pred_fallthru
        _
      // Predicated region
      $region17: #{fno_layer_forward.3} parent=11 // pred_check
        %p166 = pneg %p120
      $region18: #{fno_layer_forward.3} parent=11 // pred_check_branch
        %168 = sbr.rel (%p166) target = $region20
      $region19: #{fno_layer_forward.3} parent=11 // pred_region
        _
      $region20: #{fno_layer_forward.3} parent=11 // pred_fallthru
        _
    $region12: #{fno_layer_forward.3} parent=5 // pred_fallthru
      _
    %p169 = scmp.lt.s32.totalorder %s10, 2
    // Predicated region
    $region21: #{fno_layer_forward.3} parent=5 // pred_check
      %p170 = pneg %p169
    $region22: #{fno_layer_forward.3} parent=5 // pred_check_branch
      %172 = sbr.rel (%p170) target = $region24
    $region23: #{fno_layer_forward.3} parent=5 // pred_region
      // Predicated region
      $region25: #{fno_layer_forward.3} parent=23 // pred_check
        %p173 = pneg %p44
      $region26: #{fno_layer_forward.3} parent=23 // pred_check_branch
        %175 = sbr.rel (%p173) target = $region28
      $region27: #{fno_layer_forward.3} parent=23 // pred_region
        %s176 = smul.u32 2, %s18
        %p177 = scmp.lt.s32.totalorder %s17, 1
        %s178 = scalar_select %p177, %s17, 1
        %p179 = scmp.lt.s32.totalorder %s176, 1
        %s180 = scalar_select %p179, %s176, 1
        %s181 = smul.addr %s178, 2
        %s182 = sadd.s32 %s180, %s181
        %s183 = smul.addr %s182, 8
        %s184 = scalar_lea.vmem %s0, %s183
        %s185 = smul.u32 2, %s18
      $region28: #{fno_layer_forward.3} parent=23 // pred_fallthru
        _
      // Predicated region
      $region29: #{fno_layer_forward.3} parent=23 // pred_check
        %p186 = pneg %p72
      $region30: #{fno_layer_forward.3} parent=23 // pred_check_branch
        %188 = sbr.rel (%p186) target = $region32
      $region31: #{fno_layer_forward.3} parent=23 // pred_region
        %s189 = smul.u32 2, %s18
        %p190 = scmp.lt.s32.totalorder %s17, 1
        %s191 = scalar_select %p190, %s17, 1
        %p192 = scmp.lt.s32.totalorder %s189, 1
        %s193 = scalar_select %p192, %s189, 1
        %s194 = smul.addr %s191, 2
        %s195 = sadd.s32 %s193, %s194
        %s196 = smul.addr %s195, 8
        %s197 = scalar_lea.vmem %s1, %s196
        %s198 = smul.u32 2, %s18
      $region32: #{fno_layer_forward.3} parent=23 // pred_fallthru
        _
    $region24: #{fno_layer_forward.3} parent=5 // pred_fallthru
      _
    %p199 = scmp.le.s32.totalorder 1, %s10
    %p200 = scmp.lt.s32.totalorder %s10, 3
    %p201 = pnand %p199, %p200
    %p202 = pneg %p201
    // Predicated region
    $region33: #{fno_layer_forward.3} parent=5 // pred_check
      _
    $region34: #{fno_layer_forward.3} parent=5 // pred_check_branch
      %204 = sbr.rel (%p201) target = $region36
    $region35: #{fno_layer_forward.3} parent=5 // pred_region
      %s205 = ssub.s32 %s10, 1
      %s206 = smul.u32 2, %s20
      %p207 = scmp.lt.s32.totalorder %s19, 1
      %s208 = scalar_select %p207, %s19, 1
      %p209 = scmp.lt.s32.totalorder %s206, 1
      %s210 = scalar_select %p209, %s206, 1
      %s211 = smul.addr %s208, 2
      %s212 = sadd.s32 %s210, %s211
      %s213 = smul.addr %s212, 8
      %s214 = scalar_lea.vmem %s0, %s213
      %p215 = pneg %p50
      %p216 = pneg %p47
      %s217 = smul.u32 2, %s20
      %p218 = scmp.lt.s32.totalorder %s19, 1
      %s219 = scalar_select %p218, %s19, 1
      %p220 = scmp.lt.s32.totalorder %s217, 1
      %s221 = scalar_select %p220, %s217, 1
      %s222 = smul.addr %s219, 2
      %s223 = sadd.s32 %s221, %s222
      %s224 = smul.addr %s223, 8
      %s225 = scalar_lea.vmem %s1, %s224
      %p226 = pneg %p78
      %p227 = pneg %p75
      %p228 = pneg %p99
      %p229 = pneg %p96
      %p230 = pneg %p120
      %p231 = pneg %p117
      %p232 = pneg %p148
      %p233 = pneg %p145
      %s234 = smul.u32 2, %s20
      %p235 = scmp.lt.s32.totalorder %s19, 1
      %s236 = scalar_select %p235, %s19, 1
      %p237 = scmp.lt.s32.totalorder %s234, 1
      %s238 = scalar_select %p237, %s234, 1
      %s239 = smul.addr %s236, 2
      %s240 = sadd.s32 %s238, %s239
      %s241 = smul.addr %s240, 8
      %s242 = scalar_lea.vmem %s4, %s241
      %s243 = smul.u32 2, %s20
      %p244 = scmp.lt.s32.totalorder %s19, 1
      %s245 = scalar_select %p244, %s19, 1
      %p246 = scmp.lt.s32.totalorder %s243, 1
      %s247 = scalar_select %p246, %s243, 1
      %s248 = smul.addr %s245, 2
      %s249 = sadd.s32 %s247, %s248
      %s250 = smul.addr %s249, 8
      %s251 = scalar_lea.vmem %s0, %s250
      %s252 = smul.u32 2, %s20
      %s253 = smul.u32 2, %s20
      %p254 = scmp.lt.s32.totalorder %s19, 1
      %s255 = scalar_select %p254, %s19, 1
      %p256 = scmp.lt.s32.totalorder %s253, 1
      %s257 = scalar_select %p256, %s253, 1
      %s258 = smul.addr %s255, 2
      %s259 = sadd.s32 %s257, %s258
      %s260 = smul.addr %s259, 8
      %s261 = scalar_lea.vmem %s1, %s260
      %s262 = smul.u32 2, %s20
      %s263 = smul.u32 2, %s20
      %p264 = scmp.lt.s32.totalorder %s19, 1
      %s265 = scalar_select %p264, %s19, 1
      %p266 = scmp.lt.s32.totalorder %s263, 1
      %s267 = scalar_select %p266, %s263, 1
      %s268 = smul.addr %s265, 2
      %s269 = sadd.s32 %s267, %s268
      %s270 = smul.addr %s269, 8
      %s271 = scalar_lea.vmem %s4, %s270
      %s272 = smul.u32 2, %s20
      %v274 = vld [vmem:[%s261] sm:$0xff]
      %v275 = vld [vmem:[%s261 + $0x8] sm:$0xff]
      %v276 = vpack.c.bf16 %v274, %v274
      %v277 = vpack.c.bf16 %v275, %v275
      %v278 = vld [vmem:[%s2] sm:$0xf]
      %v279 = vld [vmem:[%s3] sm:$0xff]
      %281 = vset.pattern.permute.xlu0 0
      %282 = vperm.xlu0 %281, %v279
      %v283 = vpop.permute.xlu0 %282
      %vm285 = vcmask 64512
      %v287 = vsel %vm285, %v278, 0
      %vm289 = vcmask 1043456
      %v291 = vsel %vm289, %v276, 0
      %v294 = vsel %vm289, %v277, 0
      %296 = vmatpush.bf16.msra.mxu0 0
      %297 = vmatpush.bf16.msra.mxu0 0
      %298 = vmatpush.bf16.msra.mxu0 0
      %299 = vmatpush.bf16.msra.mxu0 0
      %300 = vmatpush.bf16.msra.mxu0 0
      %301 = vmatpush.bf16.msra.mxu0 0
      %302 = vmatpush.bf16.msra.mxu0 0
      %303 = vmatpush.bf16.msra.mxu0 %v291
      %304 = vmatmul.bf16.gmra.mxu0 %v287
      %v305 = vpop.f32.mrf.mxu0
      %v306 = vadd.f32 %v283, %v305
      %v307 = vpop.f32.mrf.mxu0
      %308 = vdwg.mxu0
      %309 = vmatpush.bf16.msra.mxu0 0
      %310 = vmatpush.bf16.msra.mxu0 0
      %311 = vmatpush.bf16.msra.mxu0 0
      %312 = vmatpush.bf16.msra.mxu0 0
      %313 = vmatpush.bf16.msra.mxu0 0
      %314 = vmatpush.bf16.msra.mxu0 0
      %315 = vmatpush.bf16.msra.mxu0 0
      %316 = vmatpush.bf16.msra.mxu0 %v294
      %317 = vmatmul.bf16.gmra.mxu0 %v287
      %v318 = vpop.f32.mrf.mxu0
      %v319 = vadd.f32 %v283, %v318
      %v320 = vpop.f32.mrf.mxu0
      %321 = vdwg.mxu0
      %v322 = vld [vmem:[%s251] sm:$0xff]
      %v323 = vld [vmem:[%s251 + $0x8] sm:$0xff]
      %v324 = vadd.f32 %v322, %v306
      %v325 = vadd.f32 %v323, %v319
      %v326 = vmul.f32 %v324, 0.5
      %v327 = vmul.f32 %v325, 0.5
      %v328 = vmul.f32 %v324, 0.70710677
      %v329 = vmul.f32 %v325, 0.70710677
      %v330 = vmul.f32 %v328, %v328
      %v331 = vmin.f32 16.0, %v330
      %v332 = vmul.f32 %v331, 2.1237322e-06
      %v333 = vadd.f32 %v332, 0.00028619796
      %v334 = vmul.f32 %v331, %v333
      %v335 = vadd.f32 %v334, 0.0036580483
      %v336 = vmul.f32 %v331, %v335
      %v337 = vadd.f32 %v336, 0.05243302
      %v338 = vmul.f32 %v331, %v337
      %v339 = vadd.f32 %v338, 0.18741608
      %v340 = vmul.f32 %v331, %v339
      %v341 = vadd.f32 %v340, 1.1283791
      %v342 = vmul.f32 %v328, %v341
      %v343 = vmul.f32 %v331, 3.8918573e-05
      %v344 = vadd.f32 %v343, 0.001143296
      %v345 = vmul.f32 %v331, %v344
      %v346 = vadd.f32 %v345, 0.014752088
      %v347 = vmul.f32 %v331, %v346
      %v348 = vadd.f32 %v347, 0.112945676
      %v349 = vmul.f32 %v331, %v348
      %v350 = vadd.f32 %v349, 0.4994258
      %v351 = vmul.f32 %v331, %v350
      %v352 = vadd.f32 %v351, 1.0
      %v353 = vrcp.pop %v352
      %v354 = vmul.f32 %v352, %v353
      %v355 = vsub.f32 1.0, %v354
      %v356 = vmul.f32 %v353, %v355
      %v357 = vadd.f32 %v353, %v356
      %vm358 = vweird.f32 %v352
      %vm359 = vweird.f32 %v353
      %vm360 = vmor %vm358, %vm359
      %v361 = vsel %vm360, %v353, %v357
      %v362 = vand.u32 2147483647, %v352
      %vm363 = vcmp.eq.f32.partialorder %v362, 8.507059e+37
      %v364 = vand.u32 %v352, 2147483648
      %v365 = vor.u32 1.1754944e-38, %v364
      %v366 = vsel %vm363, %v365, %v361
      %v367 = vmul.f32 %v342, %v366
      %v368 = vmin.f32 %v367, 1.0
      %v369 = vmax.f32 %v368, -1.0
      %v370 = vmul.f32 %v329, %v329
      %v371 = vmin.f32 16.0, %v370
      %v372 = vmul.f32 %v371, 2.1237322e-06
      %v373 = vadd.f32 %v372, 0.00028619796
      %v374 = vmul.f32 %v371, %v373
      %v375 = vadd.f32 %v374, 0.0036580483
      %v376 = vmul.f32 %v371, %v375
      %v377 = vadd.f32 %v376, 0.05243302
      %v378 = vmul.f32 %v371, %v377
      %v379 = vadd.f32 %v378, 0.18741608
      %v380 = vmul.f32 %v371, %v379
      %v381 = vadd.f32 %v380, 1.1283791
      %v382 = vmul.f32 %v329, %v381
      %v383 = vmul.f32 %v371, 3.8918573e-05
      %v384 = vadd.f32 %v383, 0.001143296
      %v385 = vmul.f32 %v371, %v384
      %v386 = vadd.f32 %v385, 0.014752088
      %v387 = vmul.f32 %v371, %v386
      %v388 = vadd.f32 %v387, 0.112945676
      %v389 = vmul.f32 %v371, %v388
      %v390 = vadd.f32 %v389, 0.4994258
      %v391 = vmul.f32 %v371, %v390
      %v392 = vadd.f32 %v391, 1.0
      %v393 = vrcp.pop %v392
      %v394 = vmul.f32 %v392, %v393
      %v395 = vsub.f32 1.0, %v394
      %v396 = vmul.f32 %v393, %v395
      %v397 = vadd.f32 %v393, %v396
      %vm398 = vweird.f32 %v392
      %vm399 = vweird.f32 %v393
      %vm400 = vmor %vm398, %vm399
      %v401 = vsel %vm400, %v393, %v397
      %v402 = vand.u32 2147483647, %v392
      %vm403 = vcmp.eq.f32.partialorder %v402, 8.507059e+37
      %v404 = vand.u32 %v392, 2147483648
      %v405 = vor.u32 1.1754944e-38, %v404
      %v406 = vsel %vm403, %v405, %v401
      %v407 = vmul.f32 %v382, %v406
      %v408 = vmin.f32 %v407, 1.0
      %v409 = vmax.f32 %v408, -1.0
      %v410 = vadd.f32 %v369, 1.0
      %v411 = vadd.f32 %v409, 1.0
      %v412 = vmul.f32 %v326, %v410
      %v413 = vmul.f32 %v327, %v411
      %414 = vst [vmem:[%s271] sm:$0xff] %v412
      %415 = vst [vmem:[%s271 + $0x8] sm:$0xff] %v413
      %s416 = smul.u32 2, %s20
      %p417 = scmp.lt.s32.totalorder %s19, 1
      %s418 = scalar_select %p417, %s19, 1
      %p419 = scmp.lt.s32.totalorder %s416, 1
      %s420 = scalar_select %p419, %s416, 1
      %s421 = smul.addr %s418, 2
      %s422 = sadd.s32 %s420, %s421
      %s423 = smul.addr %s422, 8
      %s424 = scalar_lea.vmem %s4, %s423
      // Predicated region
      $region37: #{fno_layer_forward.3} parent=35 // pred_check
        %p425 = pneg %p145
      $region38: #{fno_layer_forward.3} parent=35 // pred_check_branch
        %427 = sbr.rel (%p425) target = $region40
      $region39: #{fno_layer_forward.3} parent=35 // pred_region
        %s428 = smul.u32 2, %s20
      $region40: #{fno_layer_forward.3} parent=35 // pred_fallthru
        _
    $region36: #{fno_layer_forward.3} parent=5 // pred_fallthru
      _
    %p429 = scmp.le.s32.totalorder 2, %s10
    // Predicated region
    $region41: #{fno_layer_forward.3} parent=5 // pred_check
      %p430 = pneg %p429
    $region42: #{fno_layer_forward.3} parent=5 // pred_check_branch
      %432 = sbr.rel (%p430) target = $region44
    $region43: #{fno_layer_forward.3} parent=5 // pred_region
      %s433 = ssub.s32 %s10, 2
      // Predicated region
      $region45: #{fno_layer_forward.3} parent=43 // pred_check
        %p434 = pneg %p151
      $region46: #{fno_layer_forward.3} parent=43 // pred_check_branch
        %436 = sbr.rel (%p434) target = $region48
      $region47: #{fno_layer_forward.3} parent=43 // pred_region
        %s437 = smul.u32 2, %s22
        %p438 = scmp.lt.s32.totalorder %s21, 1
        %s439 = scalar_select %p438, %s21, 1
        %p440 = scmp.lt.s32.totalorder %s437, 1
        %s441 = scalar_select %p440, %s437, 1
        %s442 = smul.addr %s439, 2
        %s443 = sadd.s32 %s441, %s442
        %s444 = smul.addr %s443, 8
        %s445 = scalar_lea.vmem %s4, %s444
      $region48: #{fno_layer_forward.3} parent=43 // pred_fallthru
        _
    $region44: #{fno_layer_forward.3} parent=5 // pred_fallthru
      _
  $region6: #{fno_layer_forward.3} parent=0 // loop_footer
    %s14 = sadd.s32 1, %s10
  $region7: #{fno_layer_forward.3} parent=0 // loop_footer_branch
    %9 = sbr.rel target = $region3
  $region8: #{fno_layer_forward.3} parent=0 // loop_exit
    _

</llo_original>
